<compile_context>
chip_gen: v5e
topology: v5e:2x2
jax: 0.10.0
libtpu: 0.0.40
codegen_flags: <defaults>
</compile_context>

<pallas_src>
import jax
import jax.numpy as jnp
from jax import lax
from jax.experimental import pallas as pl
from jax.experimental.pallas import tpu as pltpu


def _round_up(x, m):
    return ((x + m - 1) // m) * m


def gru_recurrence_kernel(gx_ref, whh_ref, bhn_ref, out_ref, h_scratch):
    """One grid step == TB GRU time steps for one batch tile.

    gx_ref:    (TB, B_TILE, 3*Hp) f32  precomputed x @ W_ih^T with fused biases
                                       (b_ih all gates + b_hh for r/z gates)
    whh_ref:   (Hp, 3*Hp)        bf16  W_hh^T, gate blocks [r | z | n], zero-padded
    bhn_ref:   (1, Hp)           f32   b_hh of the n gate (must stay inside r*(...))
    out_ref:   (TB, B_TILE, Hp)  f32   hidden state at every time step (time-major)
    h_scratch: (B_TILE, Hp)      f32   carried hidden state across time blocks
    """
    Hp = h_scratch.shape[-1]
    tb_steps = gx_ref.shape[0]

    # initHidden(): zero the carried state at the first time block of each batch tile.
    @pl.when(pl.program_id(1) == 0)
    def _():
        h_scratch[...] = jnp.zeros_like(h_scratch)

    whh = whh_ref[...]          # resident bf16 recurrent weights
    bhn = bhn_ref[...]          # (1, Hp)

    def step(i, h):
        gx = gx_ref[i]          # (B_TILE, 3*Hp) f32, biases already fused
        gh = jnp.dot(h.astype(jnp.bfloat16), whh,
                     preferred_element_type=jnp.float32)        # (B_TILE, 3*Hp) f32
        # PyTorch GRU equations, gate order [r, z, n]; slices are 128-aligned.
        r = jax.nn.sigmoid(gx[:, 0:Hp] + gh[:, 0:Hp])
        z = jax.nn.sigmoid(gx[:, Hp:2 * Hp] + gh[:, Hp:2 * Hp])
        n = jnp.tanh(gx[:, 2 * Hp:3 * Hp] + r * (gh[:, 2 * Hp:3 * Hp] + bhn))
        h_new = (1.0 - z) * n + z * h
        out_ref[i] = h_new.astype(out_ref.dtype)                # full (8,128)-tile store
        return h_new

    h_final = lax.fori_loop(0, tb_steps, step, h_scratch[...], unroll=True)
    h_scratch[...] = h_final


def _pad_gate_cols(w_t, H, Hp, dtype):
    """(K, 3H) with H-wide gate blocks -> (K, 3*Hp) with Hp-wide zero-padded blocks."""
    K = w_t.shape[0]
    out = jnp.zeros((K, 3 * Hp), dtype)
    for g in range(3):
        out = out.at[:, g * Hp:g * Hp + H].set(w_t[:, g * H:(g + 1) * H].astype(dtype))
    return out


def encoder_rnn_forward(tokens, params, *, time_block=8, batch_tile=8):
    """tokens: int32 (B, T).  Returns (output (B, T, H) f32, hidden (1, B, H) f32)."""
    emb_table = params["embedding"]               # (vocab, H)
    B, T = tokens.shape
    H = emb_table.shape[1]

    Hp = _round_up(max(H, 128), 128)              # lane-pad hidden dim (multiple of 128)
    B_TILE = batch_tile                           # sublane multiple (8)
    B_pad = _round_up(B, B_TILE)
    TB = time_block
    T_pad = _round_up(T, TB)

    # ---- Glue (XLA): time-major embedding gather (no wrapper input transpose) and the
    # hoisted input projection as ONE large matmul over all T*B rows.
    x_tbh = emb_table[tokens.T]                   # (T, B, H) f32

    b_ih = params["b_ih"]
    b_hh = params["b_hh"]

    wih_t_pad = _pad_gate_cols(params["w_ih"].T, H, Hp, jnp.bfloat16)       # (H, 3*Hp)
    whh_cols = _pad_gate_cols(params["w_hh"].T, H, Hp, jnp.bfloat16)        # (H, 3*Hp)
    whh_t_pad = jnp.zeros((Hp, 3 * Hp), jnp.bfloat16).at[:H].set(whh_cols)  # (Hp, 3*Hp)

    # Fused bias: b_ih (all gates) + b_hh for the r/z gates (they add linearly before
    # the sigmoid).  b_hh of the n gate stays separate (it sits inside r * (...)).
    fused_bias = jnp.zeros((3 * Hp,), jnp.float32)
    fused_bias = fused_bias.at[0:H].set(b_ih[0:H] + b_hh[0:H])                   # r
    fused_bias = fused_bias.at[Hp:Hp + H].set(b_ih[H:2 * H] + b_hh[H:2 * H])     # z
    fused_bias = fused_bias.at[2 * Hp:2 * Hp + H].set(b_ih[2 * H:3 * H])         # n
    bhn = jnp.zeros((1, Hp), jnp.float32).at[0, :H].set(b_hh[2 * H:3 * H])

    gx = jnp.einsum("tbh,hg->tbg",
                    x_tbh.astype(jnp.bfloat16), wih_t_pad,
                    preferred_element_type=jnp.float32) + fused_bias       # (T, B, 3*Hp)
    gx = jnp.pad(gx, ((0, T_pad - T), (0, B_pad - B), (0, 0)))             # padded

    # ---- Pallas: only the serial recurrence runs in-kernel.
    # Note: weight BlockSpec has a constant index_map (loaded once, stays resident);
    # pl.Buffered(1) single-buffering is left as a v7x follow-up for very large H.
    out_tbh = pl.pallas_call(
        gru_recurrence_kernel,
        out_shape=jax.ShapeDtypeStruct((T_pad, B_pad, Hp), jnp.float32),
        grid_spec=pltpu.PrefetchScalarGridSpec(
            num_scalar_prefetch=0,
            grid=(B_pad // B_TILE, T_pad // TB),
            in_specs=[
                pl.BlockSpec((TB, B_TILE, 3 * Hp), lambda b, t: (t, b, 0)),
                pl.BlockSpec((Hp, 3 * Hp), lambda b, t: (0, 0)),
                pl.BlockSpec((1, Hp), lambda b, t: (0, 0)),
            ],
            out_specs=pl.BlockSpec((TB, B_TILE, Hp), lambda b, t: (t, b, 0)),
            scratch_shapes=[pltpu.VMEM((B_TILE, Hp), jnp.float32)],
        ),
        compiler_params=pltpu.CompilerParams(
            # batch tiles are independent (megacore-parallel on v7x); time is serial.
            dimension_semantics=("parallel", "arbitrary"),
            vmem_limit_bytes=32 * 1024 * 1024,
        ),
    )(gx, whh_t_pad, bhn)

    output = jnp.transpose(out_tbh[:T, :B, :H], (1, 0, 2))   # (B, T, H) batch_first
    hidden = out_tbh[T - 1, :B, :H][None]                    # (1, B, H) == last step
    return output, hidden


def init_params(key, input_size, hidden_size):
    """Deterministic parameter init matching PyTorch shapes (gate order r, z, n)."""
    k_emb, k1, k2, k3, k4 = jax.random.split(key, 5)
    H = hidden_size
    bound = 1.0 / jnp.sqrt(H)
    return {
        "embedding": jax.random.normal(k_emb, (input_size, H), jnp.float32),
        "w_ih": jax.random.uniform(k1, (3 * H, H), jnp.float32, -bound, bound),
        "w_hh": jax.random.uniform(k2, (3 * H, H), jnp.float32, -bound, bound),
        "b_ih": jax.random.uniform(k3, (3 * H,), jnp.float32, -bound, bound),
        "b_hh": jax.random.uniform(k4, (3 * H,), jnp.float32, -bound, bound),
    }


def reference_forward(tokens, params, matmul_dtype=jnp.float32):
    """Pure-JAX lax.scan reference (PyTorch GRU semantics).  matmul_dtype=bf16 gives a
    precision-matched check of the kernel; f32 gives the exact PyTorch-style math."""
    H = params["w_hh"].shape[1]
    emb = params["embedding"][tokens]                      # (B, T, H)
    x_tbh = jnp.transpose(emb, (1, 0, 2))
    wih_t = params["w_ih"].T.astype(matmul_dtype)
    whh_t = params["w_hh"].T.astype(matmul_dtype)
    bih, bhh = params["b_ih"], params["b_hh"]

    def step(h, x):
        gx = jnp.dot(x.astype(matmul_dtype), wih_t,
                     preferred_element_type=jnp.float32) + bih
        gh = jnp.dot(h.astype(matmul_dtype), whh_t,
                     preferred_element_type=jnp.float32) + bhh
        r = jax.nn.sigmoid(gx[:, :H] + gh[:, :H])
        z = jax.nn.sigmoid(gx[:, H:2 * H] + gh[:, H:2 * H])
        n = jnp.tanh(gx[:, 2 * H:] + r * gh[:, 2 * H:])
        h_new = (1.0 - z) * n + z * h
        return h_new, h_new

    h0 = jnp.zeros((tokens.shape[0], H), jnp.float32)
    h_last, out_tbh = lax.scan(step, h0, x_tbh)
    return jnp.transpose(out_tbh, (1, 0, 2)), h_last[None]


if __name__ == "__main__":
    B, T = 2, 8            # batch, sequence length
    INPUT_SIZE = 20        # vocab size
    HIDDEN = 32

    key = jax.random.PRNGKey(0)
    k_tok, k_params = jax.random.split(key)
    tokens = jax.random.randint(k_tok, (B, T), 0, INPUT_SIZE, dtype=jnp.int32)
    params = init_params(k_params, INPUT_SIZE, HIDDEN)

    output, hidden = encoder_rnn_forward(tokens, params)
    output, hidden = jax.block_until_ready((output, hidden))

    assert output.shape == (B, T, HIDDEN)
    assert hidden.shape == (1, B, HIDDEN)

    # Tight check against a precision-matched reference (bf16 matmul inputs, f32 acc).
    ref_out, ref_hid = reference_forward(tokens, params, matmul_dtype=jnp.bfloat16)
    assert jnp.allclose(output, ref_out, atol=1e-3, rtol=1e-3)
    assert jnp.allclose(hidden, ref_hid, atol=1e-3, rtol=1e-3)

    # Loose check against the pure-f32 reference (difference is only bf16 MXU rounding).
    ref_out32, ref_hid32 = reference_forward(tokens, params, matmul_dtype=jnp.float32)
    assert jnp.allclose(output, ref_out32, atol=3e-2, rtol=3e-2)
    assert jnp.allclose(hidden, ref_hid32, atol=3e-2, rtol=3e-2)

    print("KERNEL_OK")
</pallas_src>

<mosaic_0001>
module attributes {stable_mosaic.version = 11 : i64} {
  func.func @gru_recurrence_kernel(%arg0: i32, %arg1: i32, %arg2: memref<8x8x384xf32, #tpu.memory_space<vmem>>, %arg3: memref<128x384xbf16, #tpu.memory_space<vmem>>, %arg4: memref<1x128xf32, #tpu.memory_space<vmem>>, %arg5: memref<8x8x128xf32, #tpu.memory_space<vmem>>, %arg6: memref<8x128xf32, #tpu.memory_space<vmem>>) attributes {dimension_semantics = [#tpu.dimension_semantics<parallel>, #tpu.dimension_semantics<arbitrary>], iteration_bounds = array<i64: 1, 1>, scalar_prefetch = 0 : i64, scratch_operands = 1 : i64, tpu.core_type = #tpu.core_type<tc>, window_params = [{transform_indices = @transform_0, window_bounds = array<i64: 8, 8, 384>}, {pipeline_mode = #tpu.pipeline_mode<synchronous>, transform_indices = @transform_1, window_bounds = array<i64: 128, 384>}, {pipeline_mode = #tpu.pipeline_mode<synchronous>, transform_indices = @transform_2, window_bounds = array<i64: 1, 128>}, {transform_indices = @transform_3, window_bounds = array<i64: 8, 8, 128>}]} {
    %c0_i32 = arith.constant 0 : i32
    %0 = arith.cmpi eq, %arg1, %c0_i32 : i32
    %1 = arith.extui %0 : i1 to i32
    %c0_i32_0 = arith.constant 0 : i32
    %2 = arith.cmpi ne, %1, %c0_i32_0 : i32
    scf.if %2 {
      %cst_72 = arith.constant 0.000000e+00 : f32
      %303 = vector.broadcast %cst_72 : f32 to vector<8x128xf32>
      %c0_73 = arith.constant 0 : index
      %c0_74 = arith.constant 0 : index
      %304 = vector.load %arg6[%c0_73, %c0_74] : memref<8x128xf32, #tpu.memory_space<vmem>>, vector<8x128xf32>
      tpu.vector_store %arg6[%c0_73, %c0_74], %303 {strides = array<i32>} : memref<8x128xf32, #tpu.memory_space<vmem>>, vector<8x128xf32>,
    } else {
    }
    %c0 = arith.constant 0 : index
    %c0_1 = arith.constant 0 : index
    %3 = vector.load %arg3[%c0, %c0_1] : memref<128x384xbf16, #tpu.memory_space<vmem>>, vector<128x384xbf16>
    %c0_2 = arith.constant 0 : index
    %c0_3 = arith.constant 0 : index
    %4 = vector.load %arg4[%c0_2, %c0_3] : memref<1x128xf32, #tpu.memory_space<vmem>>, vector<1x128xf32>
    %c0_4 = arith.constant 0 : index
    %c0_5 = arith.constant 0 : index
    %5 = vector.load %arg6[%c0_4, %c0_5] : memref<8x128xf32, #tpu.memory_space<vmem>>, vector<8x128xf32>
    %c0_i32_6 = arith.constant 0 : i32
    %6 = arith.index_cast %c0_i32_6 : i32 to index
    %c0_7 = arith.constant 0 : index
    %c0_8 = arith.constant 0 : index
    %7 = vector.load %arg2[%6, %c0_7, %c0_8] : memref<8x8x384xf32, #tpu.memory_space<vmem>>, vector<1x8x384xf32>
    %8 = vector.shape_cast %7 : vector<1x8x384xf32> to vector<8x384xf32>
    %9 = arith.truncf %5 : vector<8x128xf32> to vector<8x128xbf16>
    %cst = arith.constant dense<0.000000e+00> : vector<8x384xf32>
    %10 = tpu.matmul %9, %3, %cst {dimension_numbers = #tpu.dot_dimension_numbers<[1], [0], [0], [1], [0, 0, 1, 1], [], []>} : vector<8x128xbf16>, vector<128x384xbf16>, vector<8x384xf32> -> vector<8x384xf32>
    %11 = vector.extract_strided_slice %8 {offsets = [0, 0], sizes = [8, 128], strides = [1, 1]} : vector<8x384xf32> to vector<8x128xf32>
    %12 = vector.extract_strided_slice %10 {offsets = [0, 0], sizes = [8, 128], strides = [1, 1]} : vector<8x384xf32> to vector<8x128xf32>
    %13 = arith.addf %11, %12 : vector<8x128xf32>
    %14 = arith.negf %13 : vector<8x128xf32>
    %15 = math.exp %14 : vector<8x128xf32>
    %cst_9 = arith.constant 1.000000e+00 : f32
    %16 = vector.broadcast %cst_9 : f32 to vector<8x128xf32>
    %17 = arith.addf %16, %15 : vector<8x128xf32>
    %18 = arith.divf %16, %17 : vector<8x128xf32>
    %19 = vector.extract_strided_slice %8 {offsets = [0, 128], sizes = [8, 128], strides = [1, 1]} : vector<8x384xf32> to vector<8x128xf32>
    %20 = vector.extract_strided_slice %10 {offsets = [0, 128], sizes = [8, 128], strides = [1, 1]} : vector<8x384xf32> to vector<8x128xf32>
    %21 = arith.addf %19, %20 : vector<8x128xf32>
    %22 = arith.negf %21 : vector<8x128xf32>
    %23 = math.exp %22 : vector<8x128xf32>
    %cst_10 = arith.constant 1.000000e+00 : f32
    %24 = vector.broadcast %cst_10 : f32 to vector<8x128xf32>
    %25 = arith.addf %24, %23 : vector<8x128xf32>
    %26 = arith.divf %24, %25 : vector<8x128xf32>
    %27 = vector.extract_strided_slice %8 {offsets = [0, 256], sizes = [8, 128], strides = [1, 1]} : vector<8x384xf32> to vector<8x128xf32>
    %28 = vector.extract_strided_slice %10 {offsets = [0, 256], sizes = [8, 128], strides = [1, 1]} : vector<8x384xf32> to vector<8x128xf32>
    %29 = vector.broadcast %4 : vector<1x128xf32> to vector<8x128xf32>
    %30 = arith.addf %28, %29 : vector<8x128xf32>
    %31 = arith.mulf %18, %30 : vector<8x128xf32>
    %32 = arith.addf %27, %31 : vector<8x128xf32>
    %33 = math.tanh %32 : vector<8x128xf32>
    %cst_11 = arith.constant 1.000000e+00 : f32
    %34 = vector.broadcast %cst_11 : f32 to vector<8x128xf32>
    %35 = arith.subf %34, %26 : vector<8x128xf32>
    %36 = arith.mulf %35, %33 : vector<8x128xf32>
    %37 = arith.mulf %26, %5 : vector<8x128xf32>
    %38 = arith.addf %36, %37 : vector<8x128xf32>
    %39 = arith.index_cast %c0_i32_6 : i32 to index
    %c0_12 = arith.constant 0 : index
    %c0_13 = arith.constant 0 : index
    %40 = vector.load %arg5[%39, %c0_12, %c0_13] : memref<8x8x128xf32, #tpu.memory_space<vmem>>, vector<1x8x128xf32>
    %41 = vector.shape_cast %40 : vector<1x8x128xf32> to vector<8x128xf32>
    %42 = vector.shape_cast %38 : vector<8x128xf32> to vector<1x8x128xf32>
    tpu.vector_store %arg5[%39, %c0_12, %c0_13], %42 {strides = array<i32>} : memref<8x8x128xf32, #tpu.memory_space<vmem>>, vector<1x8x128xf32>,
    %c1_i32 = arith.constant 1 : i32
    %43 = arith.index_cast %c1_i32 : i32 to index
    %c0_14 = arith.constant 0 : index
    %c0_15 = arith.constant 0 : index
    %44 = vector.load %arg2[%43, %c0_14, %c0_15] : memref<8x8x384xf32, #tpu.memory_space<vmem>>, vector<1x8x384xf32>
    %45 = vector.shape_cast %44 : vector<1x8x384xf32> to vector<8x384xf32>
    %46 = arith.truncf %38 : vector<8x128xf32> to vector<8x128xbf16>
    %cst_16 = arith.constant dense<0.000000e+00> : vector<8x384xf32>
    %47 = tpu.matmul %46, %3, %cst_16 {dimension_numbers = #tpu.dot_dimension_numbers<[1], [0], [0], [1], [0, 0, 1, 1], [], []>} : vector<8x128xbf16>, vector<128x384xbf16>, vector<8x384xf32> -> vector<8x384xf32>
    %48 = vector.extract_strided_slice %45 {offsets = [0, 0], sizes = [8, 128], strides = [1, 1]} : vector<8x384xf32> to vector<8x128xf32>
    %49 = vector.extract_strided_slice %47 {offsets = [0, 0], sizes = [8, 128], strides = [1, 1]} : vector<8x384xf32> to vector<8x128xf32>
    %50 = arith.addf %48, %49 : vector<8x128xf32>
    %51 = arith.negf %50 : vector<8x128xf32>
    %52 = math.exp %51 : vector<8x128xf32>
    %cst_17 = arith.constant 1.000000e+00 : f32
    %53 = vector.broadcast %cst_17 : f32 to vector<8x128xf32>
    %54 = arith.addf %53, %52 : vector<8x128xf32>
    %55 = arith.divf %53, %54 : vector<8x128xf32>
    %56 = vector.extract_strided_slice %45 {offsets = [0, 128], sizes = [8, 128], strides = [1, 1]} : vector<8x384xf32> to vector<8x128xf32>
    %57 = vector.extract_strided_slice %47 {offsets = [0, 128], sizes = [8, 128], strides = [1, 1]} : vector<8x384xf32> to vector<8x128xf32>
    %58 = arith.addf %56, %57 : vector<8x128xf32>
    %59 = arith.negf %58 : vector<8x128xf32>
    %60 = math.exp %59 : vector<8x128xf32>
    %cst_18 = arith.constant 1.000000e+00 : f32
    %61 = vector.broadcast %cst_18 : f32 to vector<8x128xf32>
    %62 = arith.addf %61, %60 : vector<8x128xf32>
    %63 = arith.divf %61, %62 : vector<8x128xf32>
    %64 = vector.extract_strided_slice %45 {offsets = [0, 256], sizes = [8, 128], strides = [1, 1]} : vector<8x384xf32> to vector<8x128xf32>
    %65 = vector.extract_strided_slice %47 {offsets = [0, 256], sizes = [8, 128], strides = [1, 1]} : vector<8x384xf32> to vector<8x128xf32>
    %66 = vector.broadcast %4 : vector<1x128xf32> to vector<8x128xf32>
    %67 = arith.addf %65, %66 : vector<8x128xf32>
    %68 = arith.mulf %55, %67 : vector<8x128xf32>
    %69 = arith.addf %64, %68 : vector<8x128xf32>
    %70 = math.tanh %69 : vector<8x128xf32>
    %cst_19 = arith.constant 1.000000e+00 : f32
    %71 = vector.broadcast %cst_19 : f32 to vector<8x128xf32>
    %72 = arith.subf %71, %63 : vector<8x128xf32>
    %73 = arith.mulf %72, %70 : vector<8x128xf32>
    %74 = arith.mulf %63, %38 : vector<8x128xf32>
    %75 = arith.addf %73, %74 : vector<8x128xf32>
    %76 = arith.index_cast %c1_i32 : i32 to index
    %c0_20 = arith.constant 0 : index
    %c0_21 = arith.constant 0 : index
    %77 = vector.load %arg5[%76, %c0_20, %c0_21] : memref<8x8x128xf32, #tpu.memory_space<vmem>>, vector<1x8x128xf32>
    %78 = vector.shape_cast %77 : vector<1x8x128xf32> to vector<8x128xf32>
    %79 = vector.shape_cast %75 : vector<8x128xf32> to vector<1x8x128xf32>
    tpu.vector_store %arg5[%76, %c0_20, %c0_21], %79 {strides = array<i32>} : memref<8x8x128xf32, #tpu.memory_space<vmem>>, vector<1x8x128xf32>,
    %c2_i32 = arith.constant 2 : i32
    %80 = arith.index_cast %c2_i32 : i32 to index
    %c0_22 = arith.constant 0 : index
    %c0_23 = arith.constant 0 : index
    %81 = vector.load %arg2[%80, %c0_22, %c0_23] : memref<8x8x384xf32, #tpu.memory_space<vmem>>, vector<1x8x384xf32>
    %82 = vector.shape_cast %81 : vector<1x8x384xf32> to vector<8x384xf32>
    %83 = arith.truncf %75 : vector<8x128xf32> to vector<8x128xbf16>
    %cst_24 = arith.constant dense<0.000000e+00> : vector<8x384xf32>
    %84 = tpu.matmul %83, %3, %cst_24 {dimension_numbers = #tpu.dot_dimension_numbers<[1], [0], [0], [1], [0, 0, 1, 1], [], []>} : vector<8x128xbf16>, vector<128x384xbf16>, vector<8x384xf32> -> vector<8x384xf32>
    %85 = vector.extract_strided_slice %82 {offsets = [0, 0], sizes = [8, 128], strides = [1, 1]} : vector<8x384xf32> to vector<8x128xf32>
    %86 = vector.extract_strided_slice %84 {offsets = [0, 0], sizes = [8, 128], strides = [1, 1]} : vector<8x384xf32> to vector<8x128xf32>
    %87 = arith.addf %85, %86 : vector<8x128xf32>
    %88 = arith.negf %87 : vector<8x128xf32>
    %89 = math.exp %88 : vector<8x128xf32>
    %cst_25 = arith.constant 1.000000e+00 : f32
    %90 = vector.broadcast %cst_25 : f32 to vector<8x128xf32>
    %91 = arith.addf %90, %89 : vector<8x128xf32>
    %92 = arith.divf %90, %91 : vector<8x128xf32>
    %93 = vector.extract_strided_slice %82 {offsets = [0, 128], sizes = [8, 128], strides = [1, 1]} : vector<8x384xf32> to vector<8x128xf32>
    %94 = vector.extract_strided_slice %84 {offsets = [0, 128], sizes = [8, 128], strides = [1, 1]} : vector<8x384xf32> to vector<8x128xf32>
    %95 = arith.addf %93, %94 : vector<8x128xf32>
    %96 = arith.negf %95 : vector<8x128xf32>
    %97 = math.exp %96 : vector<8x128xf32>
    %cst_26 = arith.constant 1.000000e+00 : f32
    %98 = vector.broadcast %cst_26 : f32 to vector<8x128xf32>
    %99 = arith.addf %98, %97 : vector<8x128xf32>
    %100 = arith.divf %98, %99 : vector<8x128xf32>
    %101 = vector.extract_strided_slice %82 {offsets = [0, 256], sizes = [8, 128], strides = [1, 1]} : vector<8x384xf32> to vector<8x128xf32>
    %102 = vector.extract_strided_slice %84 {offsets = [0, 256], sizes = [8, 128], strides = [1, 1]} : vector<8x384xf32> to vector<8x128xf32>
    %103 = vector.broadcast %4 : vector<1x128xf32> to vector<8x128xf32>
    %104 = arith.addf %102, %103 : vector<8x128xf32>
    %105 = arith.mulf %92, %104 : vector<8x128xf32>
    %106 = arith.addf %101, %105 : vector<8x128xf32>
    %107 = math.tanh %106 : vector<8x128xf32>
    %cst_27 = arith.constant 1.000000e+00 : f32
    %108 = vector.broadcast %cst_27 : f32 to vector<8x128xf32>
    %109 = arith.subf %108, %100 : vector<8x128xf32>
    %110 = arith.mulf %109, %107 : vector<8x128xf32>
    %111 = arith.mulf %100, %75 : vector<8x128xf32>
    %112 = arith.addf %110, %111 : vector<8x128xf32>
    %113 = arith.index_cast %c2_i32 : i32 to index
    %c0_28 = arith.constant 0 : index
    %c0_29 = arith.constant 0 : index
    %114 = vector.load %arg5[%113, %c0_28, %c0_29] : memref<8x8x128xf32, #tpu.memory_space<vmem>>, vector<1x8x128xf32>
    %115 = vector.shape_cast %114 : vector<1x8x128xf32> to vector<8x128xf32>
    %116 = vector.shape_cast %112 : vector<8x128xf32> to vector<1x8x128xf32>
    tpu.vector_store %arg5[%113, %c0_28, %c0_29], %116 {strides = array<i32>} : memref<8x8x128xf32, #tpu.memory_space<vmem>>, vector<1x8x128xf32>,
    %c3_i32 = arith.constant 3 : i32
    %117 = arith.index_cast %c3_i32 : i32 to index
    %c0_30 = arith.constant 0 : index
    %c0_31 = arith.constant 0 : index
    %118 = vector.load %arg2[%117, %c0_30, %c0_31] : memref<8x8x384xf32, #tpu.memory_space<vmem>>, vector<1x8x384xf32>
    %119 = vector.shape_cast %118 : vector<1x8x384xf32> to vector<8x384xf32>
    %120 = arith.truncf %112 : vector<8x128xf32> to vector<8x128xbf16>
    %cst_32 = arith.constant dense<0.000000e+00> : vector<8x384xf32>
    %121 = tpu.matmul %120, %3, %cst_32 {dimension_numbers = #tpu.dot_dimension_numbers<[1], [0], [0], [1], [0, 0, 1, 1], [], []>} : vector<8x128xbf16>, vector<128x384xbf16>, vector<8x384xf32> -> vector<8x384xf32>
    %122 = vector.extract_strided_slice %119 {offsets = [0, 0], sizes = [8, 128], strides = [1, 1]} : vector<8x384xf32> to vector<8x128xf32>
    %123 = vector.extract_strided_slice %121 {offsets = [0, 0], sizes = [8, 128], strides = [1, 1]} : vector<8x384xf32> to vector<8x128xf32>
    %124 = arith.addf %122, %123 : vector<8x128xf32>
    %125 = arith.negf %124 : vector<8x128xf32>
    %126 = math.exp %125 : vector<8x128xf32>
    %cst_33 = arith.constant 1.000000e+00 : f32
    %127 = vector.broadcast %cst_33 : f32 to vector<8x128xf32>
    %128 = arith.addf %127, %126 : vector<8x128xf32>
    %129 = arith.divf %127, %128 : vector<8x128xf32>
    %130 = vector.extract_strided_slice %119 {offsets = [0, 128], sizes = [8, 128], strides = [1, 1]} : vector<8x384xf32> to vector<8x128xf32>
    %131 = vector.extract_strided_slice %121 {offsets = [0, 128], sizes = [8, 128], strides = [1, 1]} : vector<8x384xf32> to vector<8x128xf32>
    %132 = arith.addf %130, %131 : vector<8x128xf32>
    %133 = arith.negf %132 : vector<8x128xf32>
    %134 = math.exp %133 : vector<8x128xf32>
    %cst_34 = arith.constant 1.000000e+00 : f32
    %135 = vector.broadcast %cst_34 : f32 to vector<8x128xf32>
    %136 = arith.addf %135, %134 : vector<8x128xf32>
    %137 = arith.divf %135, %136 : vector<8x128xf32>
    %138 = vector.extract_strided_slice %119 {offsets = [0, 256], sizes = [8, 128], strides = [1, 1]} : vector<8x384xf32> to vector<8x128xf32>
    %139 = vector.extract_strided_slice %121 {offsets = [0, 256], sizes = [8, 128], strides = [1, 1]} : vector<8x384xf32> to vector<8x128xf32>
    %140 = vector.broadcast %4 : vector<1x128xf32> to vector<8x128xf32>
    %141 = arith.addf %139, %140 : vector<8x128xf32>
    %142 = arith.mulf %129, %141 : vector<8x128xf32>
    %143 = arith.addf %138, %142 : vector<8x128xf32>
    %144 = math.tanh %143 : vector<8x128xf32>
    %cst_35 = arith.constant 1.000000e+00 : f32
    %145 = vector.broadcast %cst_35 : f32 to vector<8x128xf32>
    %146 = arith.subf %145, %137 : vector<8x128xf32>
    %147 = arith.mulf %146, %144 : vector<8x128xf32>
    %148 = arith.mulf %137, %112 : vector<8x128xf32>
    %149 = arith.addf %147, %148 : vector<8x128xf32>
    %150 = arith.index_cast %c3_i32 : i32 to index
    %c0_36 = arith.constant 0 : index
    %c0_37 = arith.constant 0 : index
    %151 = vector.load %arg5[%150, %c0_36, %c0_37] : memref<8x8x128xf32, #tpu.memory_space<vmem>>, vector<1x8x128xf32>
    %152 = vector.shape_cast %151 : vector<1x8x128xf32> to vector<8x128xf32>
    %153 = vector.shape_cast %149 : vector<8x128xf32> to vector<1x8x128xf32>
    tpu.vector_store %arg5[%150, %c0_36, %c0_37], %153 {strides = array<i32>} : memref<8x8x128xf32, #tpu.memory_space<vmem>>, vector<1x8x128xf32>,
    %c4_i32 = arith.constant 4 : i32
    %154 = arith.index_cast %c4_i32 : i32 to index
    %c0_38 = arith.constant 0 : index
    %c0_39 = arith.constant 0 : index
    %155 = vector.load %arg2[%154, %c0_38, %c0_39] : memref<8x8x384xf32, #tpu.memory_space<vmem>>, vector<1x8x384xf32>
    %156 = vector.shape_cast %155 : vector<1x8x384xf32> to vector<8x384xf32>
    %157 = arith.truncf %149 : vector<8x128xf32> to vector<8x128xbf16>
    %cst_40 = arith.constant dense<0.000000e+00> : vector<8x384xf32>
    %158 = tpu.matmul %157, %3, %cst_40 {dimension_numbers = #tpu.dot_dimension_numbers<[1], [0], [0], [1], [0, 0, 1, 1], [], []>} : vector<8x128xbf16>, vector<128x384xbf16>, vector<8x384xf32> -> vector<8x384xf32>
    %159 = vector.extract_strided_slice %156 {offsets = [0, 0], sizes = [8, 128], strides = [1, 1]} : vector<8x384xf32> to vector<8x128xf32>
    %160 = vector.extract_strided_slice %158 {offsets = [0, 0], sizes = [8, 128], strides = [1, 1]} : vector<8x384xf32> to vector<8x128xf32>
    %161 = arith.addf %159, %160 : vector<8x128xf32>
    %162 = arith.negf %161 : vector<8x128xf32>
    %163 = math.exp %162 : vector<8x128xf32>
    %cst_41 = arith.constant 1.000000e+00 : f32
    %164 = vector.broadcast %cst_41 : f32 to vector<8x128xf32>
    %165 = arith.addf %164, %163 : vector<8x128xf32>
    %166 = arith.divf %164, %165 : vector<8x128xf32>
    %167 = vector.extract_strided_slice %156 {offsets = [0, 128], sizes = [8, 128], strides = [1, 1]} : vector<8x384xf32> to vector<8x128xf32>
    %168 = vector.extract_strided_slice %158 {offsets = [0, 128], sizes = [8, 128], strides = [1, 1]} : vector<8x384xf32> to vector<8x128xf32>
    %169 = arith.addf %167, %168 : vector<8x128xf32>
    %170 = arith.negf %169 : vector<8x128xf32>
    %171 = math.exp %170 : vector<8x128xf32>
    %cst_42 = arith.constant 1.000000e+00 : f32
    %172 = vector.broadcast %cst_42 : f32 to vector<8x128xf32>
    %173 = arith.addf %172, %171 : vector<8x128xf32>
    %174 = arith.divf %172, %173 : vector<8x128xf32>
    %175 = vector.extract_strided_slice %156 {offsets = [0, 256], sizes = [8, 128], strides = [1, 1]} : vector<8x384xf32> to vector<8x128xf32>
    %176 = vector.extract_strided_slice %158 {offsets = [0, 256], sizes = [8, 128], strides = [1, 1]} : vector<8x384xf32> to vector<8x128xf32>
    %177 = vector.broadcast %4 : vector<1x128xf32> to vector<8x128xf32>
    %178 = arith.addf %176, %177 : vector<8x128xf32>
    %179 = arith.mulf %166, %178 : vector<8x128xf32>
    %180 = arith.addf %175, %179 : vector<8x128xf32>
    %181 = math.tanh %180 : vector<8x128xf32>
    %cst_43 = arith.constant 1.000000e+00 : f32
    %182 = vector.broadcast %cst_43 : f32 to vector<8x128xf32>
    %183 = arith.subf %182, %174 : vector<8x128xf32>
    %184 = arith.mulf %183, %181 : vector<8x128xf32>
    %185 = arith.mulf %174, %149 : vector<8x128xf32>
    %186 = arith.addf %184, %185 : vector<8x128xf32>
    %187 = arith.index_cast %c4_i32 : i32 to index
    %c0_44 = arith.constant 0 : index
    %c0_45 = arith.constant 0 : index
    %188 = vector.load %arg5[%187, %c0_44, %c0_45] : memref<8x8x128xf32, #tpu.memory_space<vmem>>, vector<1x8x128xf32>
    %189 = vector.shape_cast %188 : vector<1x8x128xf32> to vector<8x128xf32>
    %190 = vector.shape_cast %186 : vector<8x128xf32> to vector<1x8x128xf32>
    tpu.vector_store %arg5[%187, %c0_44, %c0_45], %190 {strides = array<i32>} : memref<8x8x128xf32, #tpu.memory_space<vmem>>, vector<1x8x128xf32>,
    %c5_i32 = arith.constant 5 : i32
    %191 = arith.index_cast %c5_i32 : i32 to index
    %c0_46 = arith.constant 0 : index
    %c0_47 = arith.constant 0 : index
    %192 = vector.load %arg2[%191, %c0_46, %c0_47] : memref<8x8x384xf32, #tpu.memory_space<vmem>>, vector<1x8x384xf32>
    %193 = vector.shape_cast %192 : vector<1x8x384xf32> to vector<8x384xf32>
    %194 = arith.truncf %186 : vector<8x128xf32> to vector<8x128xbf16>
    %cst_48 = arith.constant dense<0.000000e+00> : vector<8x384xf32>
    %195 = tpu.matmul %194, %3, %cst_48 {dimension_numbers = #tpu.dot_dimension_numbers<[1], [0], [0], [1], [0, 0, 1, 1], [], []>} : vector<8x128xbf16>, vector<128x384xbf16>, vector<8x384xf32> -> vector<8x384xf32>
    %196 = vector.extract_strided_slice %193 {offsets = [0, 0], sizes = [8, 128], strides = [1, 1]} : vector<8x384xf32> to vector<8x128xf32>
    %197 = vector.extract_strided_slice %195 {offsets = [0, 0], sizes = [8, 128], strides = [1, 1]} : vector<8x384xf32> to vector<8x128xf32>
    %198 = arith.addf %196, %197 : vector<8x128xf32>
    %199 = arith.negf %198 : vector<8x128xf32>
    %200 = math.exp %199 : vector<8x128xf32>
    %cst_49 = arith.constant 1.000000e+00 : f32
    %201 = vector.broadcast %cst_49 : f32 to vector<8x128xf32>
    %202 = arith.addf %201, %200 : vector<8x128xf32>
    %203 = arith.divf %201, %202 : vector<8x128xf32>
    %204 = vector.extract_strided_slice %193 {offsets = [0, 128], sizes = [8, 128], strides = [1, 1]} : vector<8x384xf32> to vector<8x128xf32>
    %205 = vector.extract_strided_slice %195 {offsets = [0, 128], sizes = [8, 128], strides = [1, 1]} : vector<8x384xf32> to vector<8x128xf32>
    %206 = arith.addf %204, %205 : vector<8x128xf32>
    %207 = arith.negf %206 : vector<8x128xf32>
    %208 = math.exp %207 : vector<8x128xf32>
    %cst_50 = arith.constant 1.000000e+00 : f32
    %209 = vector.broadcast %cst_50 : f32 to vector<8x128xf32>
    %210 = arith.addf %209, %208 : vector<8x128xf32>
    %211 = arith.divf %209, %210 : vector<8x128xf32>
    %212 = vector.extract_strided_slice %193 {offsets = [0, 256], sizes = [8, 128], strides = [1, 1]} : vector<8x384xf32> to vector<8x128xf32>
    %213 = vector.extract_strided_slice %195 {offsets = [0, 256], sizes = [8, 128], strides = [1, 1]} : vector<8x384xf32> to vector<8x128xf32>
    %214 = vector.broadcast %4 : vector<1x128xf32> to vector<8x128xf32>
    %215 = arith.addf %213, %214 : vector<8x128xf32>
    %216 = arith.mulf %203, %215 : vector<8x128xf32>
    %217 = arith.addf %212, %216 : vector<8x128xf32>
    %218 = math.tanh %217 : vector<8x128xf32>
    %cst_51 = arith.constant 1.000000e+00 : f32
    %219 = vector.broadcast %cst_51 : f32 to vector<8x128xf32>
    %220 = arith.subf %219, %211 : vector<8x128xf32>
    %221 = arith.mulf %220, %218 : vector<8x128xf32>
    %222 = arith.mulf %211, %186 : vector<8x128xf32>
    %223 = arith.addf %221, %222 : vector<8x128xf32>
    %224 = arith.index_cast %c5_i32 : i32 to index
    %c0_52 = arith.constant 0 : index
    %c0_53 = arith.constant 0 : index
    %225 = vector.load %arg5[%224, %c0_52, %c0_53] : memref<8x8x128xf32, #tpu.memory_space<vmem>>, vector<1x8x128xf32>
    %226 = vector.shape_cast %225 : vector<1x8x128xf32> to vector<8x128xf32>
    %227 = vector.shape_cast %223 : vector<8x128xf32> to vector<1x8x128xf32>
    tpu.vector_store %arg5[%224, %c0_52, %c0_53], %227 {strides = array<i32>} : memref<8x8x128xf32, #tpu.memory_space<vmem>>, vector<1x8x128xf32>,
    %c6_i32 = arith.constant 6 : i32
    %228 = arith.index_cast %c6_i32 : i32 to index
    %c0_54 = arith.constant 0 : index
    %c0_55 = arith.constant 0 : index
    %229 = vector.load %arg2[%228, %c0_54, %c0_55] : memref<8x8x384xf32, #tpu.memory_space<vmem>>, vector<1x8x384xf32>
    %230 = vector.shape_cast %229 : vector<1x8x384xf32> to vector<8x384xf32>
    %231 = arith.truncf %223 : vector<8x128xf32> to vector<8x128xbf16>
    %cst_56 = arith.constant dense<0.000000e+00> : vector<8x384xf32>
    %232 = tpu.matmul %231, %3, %cst_56 {dimension_numbers = #tpu.dot_dimension_numbers<[1], [0], [0], [1], [0, 0, 1, 1], [], []>} : vector<8x128xbf16>, vector<128x384xbf16>, vector<8x384xf32> -> vector<8x384xf32>
    %233 = vector.extract_strided_slice %230 {offsets = [0, 0], sizes = [8, 128], strides = [1, 1]} : vector<8x384xf32> to vector<8x128xf32>
    %234 = vector.extract_strided_slice %232 {offsets = [0, 0], sizes = [8, 128], strides = [1, 1]} : vector<8x384xf32> to vector<8x128xf32>
    %235 = arith.addf %233, %234 : vector<8x128xf32>
    %236 = arith.negf %235 : vector<8x128xf32>
    %237 = math.exp %236 : vector<8x128xf32>
    %cst_57 = arith.constant 1.000000e+00 : f32
    %238 = vector.broadcast %cst_57 : f32 to vector<8x128xf32>
    %239 = arith.addf %238, %237 : vector<8x128xf32>
    %240 = arith.divf %238, %239 : vector<8x128xf32>
    %241 = vector.extract_strided_slice %230 {offsets = [0, 128], sizes = [8, 128], strides = [1, 1]} : vector<8x384xf32> to vector<8x128xf32>
    %242 = vector.extract_strided_slice %232 {offsets = [0, 128], sizes = [8, 128], strides = [1, 1]} : vector<8x384xf32> to vector<8x128xf32>
    %243 = arith.addf %241, %242 : vector<8x128xf32>
    %244 = arith.negf %243 : vector<8x128xf32>
    %245 = math.exp %244 : vector<8x128xf32>
    %cst_58 = arith.constant 1.000000e+00 : f32
    %246 = vector.broadcast %cst_58 : f32 to vector<8x128xf32>
    %247 = arith.addf %246, %245 : vector<8x128xf32>
    %248 = arith.divf %246, %247 : vector<8x128xf32>
    %249 = vector.extract_strided_slice %230 {offsets = [0, 256], sizes = [8, 128], strides = [1, 1]} : vector<8x384xf32> to vector<8x128xf32>
    %250 = vector.extract_strided_slice %232 {offsets = [0, 256], sizes = [8, 128], strides = [1, 1]} : vector<8x384xf32> to vector<8x128xf32>
    %251 = vector.broadcast %4 : vector<1x128xf32> to vector<8x128xf32>
    %252 = arith.addf %250, %251 : vector<8x128xf32>
    %253 = arith.mulf %240, %252 : vector<8x128xf32>
    %254 = arith.addf %249, %253 : vector<8x128xf32>
    %255 = math.tanh %254 : vector<8x128xf32>
    %cst_59 = arith.constant 1.000000e+00 : f32
    %256 = vector.broadcast %cst_59 : f32 to vector<8x128xf32>
    %257 = arith.subf %256, %248 : vector<8x128xf32>
    %258 = arith.mulf %257, %255 : vector<8x128xf32>
    %259 = arith.mulf %248, %223 : vector<8x128xf32>
    %260 = arith.addf %258, %259 : vector<8x128xf32>
    %261 = arith.index_cast %c6_i32 : i32 to index
    %c0_60 = arith.constant 0 : index
    %c0_61 = arith.constant 0 : index
    %262 = vector.load %arg5[%261, %c0_60, %c0_61] : memref<8x8x128xf32, #tpu.memory_space<vmem>>, vector<1x8x128xf32>
    %263 = vector.shape_cast %262 : vector<1x8x128xf32> to vector<8x128xf32>
    %264 = vector.shape_cast %260 : vector<8x128xf32> to vector<1x8x128xf32>
    tpu.vector_store %arg5[%261, %c0_60, %c0_61], %264 {strides = array<i32>} : memref<8x8x128xf32, #tpu.memory_space<vmem>>, vector<1x8x128xf32>,
    %c7_i32 = arith.constant 7 : i32
    %265 = arith.index_cast %c7_i32 : i32 to index
    %c0_62 = arith.constant 0 : index
    %c0_63 = arith.constant 0 : index
    %266 = vector.load %arg2[%265, %c0_62, %c0_63] : memref<8x8x384xf32, #tpu.memory_space<vmem>>, vector<1x8x384xf32>
    %267 = vector.shape_cast %266 : vector<1x8x384xf32> to vector<8x384xf32>
    %268 = arith.truncf %260 : vector<8x128xf32> to vector<8x128xbf16>
    %cst_64 = arith.constant dense<0.000000e+00> : vector<8x384xf32>
    %269 = tpu.matmul %268, %3, %cst_64 {dimension_numbers = #tpu.dot_dimension_numbers<[1], [0], [0], [1], [0, 0, 1, 1], [], []>} : vector<8x128xbf16>, vector<128x384xbf16>, vector<8x384xf32> -> vector<8x384xf32>
    %270 = vector.extract_strided_slice %267 {offsets = [0, 0], sizes = [8, 128], strides = [1, 1]} : vector<8x384xf32> to vector<8x128xf32>
    %271 = vector.extract_strided_slice %269 {offsets = [0, 0], sizes = [8, 128], strides = [1, 1]} : vector<8x384xf32> to vector<8x128xf32>
    %272 = arith.addf %270, %271 : vector<8x128xf32>
    %273 = arith.negf %272 : vector<8x128xf32>
    %274 = math.exp %273 : vector<8x128xf32>
    %cst_65 = arith.constant 1.000000e+00 : f32
    %275 = vector.broadcast %cst_65 : f32 to vector<8x128xf32>
    %276 = arith.addf %275, %274 : vector<8x128xf32>
    %277 = arith.divf %275, %276 : vector<8x128xf32>
    %278 = vector.extract_strided_slice %267 {offsets = [0, 128], sizes = [8, 128], strides = [1, 1]} : vector<8x384xf32> to vector<8x128xf32>
    %279 = vector.extract_strided_slice %269 {offsets = [0, 128], sizes = [8, 128], strides = [1, 1]} : vector<8x384xf32> to vector<8x128xf32>
    %280 = arith.addf %278, %279 : vector<8x128xf32>
    %281 = arith.negf %280 : vector<8x128xf32>
    %282 = math.exp %281 : vector<8x128xf32>
    %cst_66 = arith.constant 1.000000e+00 : f32
    %283 = vector.broadcast %cst_66 : f32 to vector<8x128xf32>
    %284 = arith.addf %283, %282 : vector<8x128xf32>
    %285 = arith.divf %283, %284 : vector<8x128xf32>
    %286 = vector.extract_strided_slice %267 {offsets = [0, 256], sizes = [8, 128], strides = [1, 1]} : vector<8x384xf32> to vector<8x128xf32>
    %287 = vector.extract_strided_slice %269 {offsets = [0, 256], sizes = [8, 128], strides = [1, 1]} : vector<8x384xf32> to vector<8x128xf32>
    %288 = vector.broadcast %4 : vector<1x128xf32> to vector<8x128xf32>
    %289 = arith.addf %287, %288 : vector<8x128xf32>
    %290 = arith.mulf %277, %289 : vector<8x128xf32>
    %291 = arith.addf %286, %290 : vector<8x128xf32>
    %292 = math.tanh %291 : vector<8x128xf32>
    %cst_67 = arith.constant 1.000000e+00 : f32
    %293 = vector.broadcast %cst_67 : f32 to vector<8x128xf32>
    %294 = arith.subf %293, %285 : vector<8x128xf32>
    %295 = arith.mulf %294, %292 : vector<8x128xf32>
    %296 = arith.mulf %285, %260 : vector<8x128xf32>
    %297 = arith.addf %295, %296 : vector<8x128xf32>
    %298 = arith.index_cast %c7_i32 : i32 to index
    %c0_68 = arith.constant 0 : index
    %c0_69 = arith.constant 0 : index
    %299 = vector.load %arg5[%298, %c0_68, %c0_69] : memref<8x8x128xf32, #tpu.memory_space<vmem>>, vector<1x8x128xf32>
    %300 = vector.shape_cast %299 : vector<1x8x128xf32> to vector<8x128xf32>
    %301 = vector.shape_cast %297 : vector<8x128xf32> to vector<1x8x128xf32>
    tpu.vector_store %arg5[%298, %c0_68, %c0_69], %301 {strides = array<i32>} : memref<8x8x128xf32, #tpu.memory_space<vmem>>, vector<1x8x128xf32>,
    %c8_i32 = arith.constant 8 : i32
    %c0_70 = arith.constant 0 : index
    %c0_71 = arith.constant 0 : index
    %302 = vector.load %arg6[%c0_70, %c0_71] : memref<8x128xf32, #tpu.memory_space<vmem>>, vector<8x128xf32>
    tpu.vector_store %arg6[%c0_70, %c0_71], %297 {strides = array<i32>} : memref<8x128xf32, #tpu.memory_space<vmem>>, vector<8x128xf32>,
    return
  }
  func.func @transform_0(%arg0: i32, %arg1: i32) -> (i32, i32, i32) {
    %c0_i32 = arith.constant 0 : i32
    %c0_i32_0 = arith.constant 0 : i32
    return %arg1, %arg0, %c0_i32 : i32, i32, i32
  }
  func.func @transform_1(%arg0: i32, %arg1: i32) -> (i32, i32) {
    %c0_i32 = arith.constant 0 : i32
    %c0_i32_0 = arith.constant 0 : i32
    %c0_i32_1 = arith.constant 0 : i32
    return %c0_i32, %c0_i32_0 : i32, i32
  }
  func.func @transform_2(%arg0: i32, %arg1: i32) -> (i32, i32) {
    %c0_i32 = arith.constant 0 : i32
    %c0_i32_0 = arith.constant 0 : i32
    %c0_i32_1 = arith.constant 0 : i32
    return %c0_i32, %c0_i32_0 : i32, i32
  }
  func.func @transform_3(%arg0: i32, %arg1: i32) -> (i32, i32, i32) {
    %c0_i32 = arith.constant 0 : i32
    %c0_i32_0 = arith.constant 0 : i32
    return %arg1, %arg0, %c0_i32 : i32, i32, i32
  }
}

</mosaic_0001>

<llo_original>
// kernel: tpu_custom_call.1
$region0: #{tpu_custom_call.1}
  #allocation0 [shape = 'u32[]', space=smem, size = 0x4, offset = 0x4, fixed_abs, tag = 'smem constant byte address 0x4 - core index']
  #allocation1 [shape = 'u32[72,128]{1,0:T(1,128)}', space=vmem, size = 0x9000, scoped, tag = 'internal scratch']
  #allocation2 [shape = 'f32[8,128]{1,0:T(8,128)}', space=vmem, size = 0x1000, scoped, tag = 'scratch operand']
  %s0 = inlined_call_operand.hbm [shape: f32[8,8,384], index: 0, kind: input, shape index: {}]
  %s1 = inlined_call_operand.hbm [shape: bf16[128,384], index: 1, kind: input, shape index: {}]
  %s2 = inlined_call_operand.vmem [shape: f32[1,128], index: 2, kind: input, shape index: {}]
  %s3 = inlined_call_operand.hbm [shape: f32[8,8,128], index: 3, kind: output, shape index: {}]
  %s4 = sld [smem:[#allocation0]]
  $region34: #{tpu_custom_call.1} parent=0
    _
  %s6 = ssub.s32 1, %s4
  %s7 = scalar_select 0, %s6, %s4
  $region1: #{tpu_custom_call.1} parent=0
    #allocation3 [shape = 'u8[98304]{0}', space=vmem, size = 0x18000, scoped, tag = 'input window, operand 0, single buffered']
    #allocation4 [shape = 's32[1]{0}', space=sflag, size = 0x4, scoped, tag = 'scoped memory for tpu_custom_call.1']
    #allocation5 [shape = 's32[1]{0}', space=sflag, size = 0x4, scoped, tag = 'scoped memory for tpu_custom_call.1']
    #allocation6 [shape = 'u8[98304]{0}', space=vmem, size = 0x18000, scoped, tag = 'input window, operand 1, single buffered']
    #allocation7 [shape = 's32[1]{0}', space=sflag, size = 0x4, scoped, tag = 'scoped memory for tpu_custom_call.1']
    #allocation8 [shape = 'u8[32768]{0}', space=vmem, size = 0x8000, scoped, tag = 'output window, operand 0, single buffered']
    %8 = vsyncpa [#allocation4], 0
    %9 = vsyncpa [#allocation7], 0
    %10 = vsyncpa [#allocation5], 0
    // Predicated region
    $region2: #{tpu_custom_call.1} parent=1 // pred_check
      _
    $region3: #{tpu_custom_call.1} parent=1 // pred_check_branch
      %12 = sbr.rel (0) target = $region5
    $region4: #{tpu_custom_call.1} parent=1 // pred_region
      %14 = vsyncadd [#allocation4], 0
      %s15 = sshll.u32 %s0, 4
      %s16 = int_to_ptr.hbm [resolvable:$true] %s15
      %s17 = sshll.u32 [#allocation3], 4
      %s18 = int_to_ptr.vmem [resolvable:$true] %s17
      %23 = dma.hbm_to_vmem [thread:$0]  %s16, 3072, %s18, [#allocation4], 384, 384, 24
    $region5: #{tpu_custom_call.1} parent=1 // pred_fallthru
      _
    // Predicated region
    $region6: #{tpu_custom_call.1} parent=1 // pred_check
      _
    $region7: #{tpu_custom_call.1} parent=1 // pred_check_branch
      %25 = sbr.rel (0) target = $region9
    $region8: #{tpu_custom_call.1} parent=1 // pred_region
      %27 = vsyncadd [#allocation7], 0
      %s28 = sshll.u32 %s1, 4
      %s29 = int_to_ptr.hbm [resolvable:$true] %s28
      %s30 = sshll.u32 [#allocation6], 4
      %s31 = int_to_ptr.vmem [resolvable:$true] %s30
      %36 = dma.hbm_to_vmem [thread:$0]  %s29, 3072, %s31, [#allocation7], 192, 192, 12
    $region9: #{tpu_custom_call.1} parent=1 // pred_fallthru
      _
    // Predicated region
    $region10: #{tpu_custom_call.1} parent=1 // pred_check
      _
    $region11: #{tpu_custom_call.1} parent=1 // pred_check_branch
      %38 = sbr.rel (0) target = $region13
    $region12: #{tpu_custom_call.1} parent=1 // pred_region
      _
    $region13: #{tpu_custom_call.1} parent=1 // pred_fallthru
      _
    // Predicated region
    $region14: #{tpu_custom_call.1} parent=1 // pred_check
      _
    $region15: #{tpu_custom_call.1} parent=1 // pred_check_branch
      %40 = sbr.rel (0) target = $region17
    $region16: #{tpu_custom_call.1} parent=1 // pred_region
      %42 = dma.done [#allocation4], 3072
    $region17: #{tpu_custom_call.1} parent=1 // pred_fallthru
      _
    // Predicated region
    $region18: #{tpu_custom_call.1} parent=1 // pred_check
      _
    $region19: #{tpu_custom_call.1} parent=1 // pred_check_branch
      %44 = sbr.rel (0) target = $region21
    $region20: #{tpu_custom_call.1} parent=1 // pred_region
      %46 = dma.done [#allocation7], 3072
    $region21: #{tpu_custom_call.1} parent=1 // pred_fallthru
      _
    %p47 = scmp.eq.s32.totalorder 0, 0
    // Predicated region
    $region22: #{tpu_custom_call.1} parent=1 // pred_check
      %p48 = pneg %p47
    $region23: #{tpu_custom_call.1} parent=1 // pred_check_branch
      %50 = sbr.rel (%p48) target = $region25
    $region24: #{tpu_custom_call.1} parent=1 // pred_region
      %51 = vst [vmem:[#allocation2] sm:$0xff] 0.0
    $region25: #{tpu_custom_call.1} parent=1 // pred_fallthru
      _
    %v52 = vld [vmem:[#allocation6] sm:$0xff]
    %v53 = vld [vmem:[#allocation6 + $0x8] sm:$0xf]
    %v54 = vld [vmem:[#allocation6 + $0xc] sm:$0xff]
    %v55 = vld [vmem:[#allocation6 + $0x14] sm:$0xf]
    %v56 = vld [vmem:[#allocation6 + $0x18] sm:$0xff]
    %v57 = vld [vmem:[#allocation6 + $0x20] sm:$0xf]
    %v58 = vld [vmem:[#allocation6 + $0x24] sm:$0xff]
    %v59 = vld [vmem:[#allocation6 + $0x2c] sm:$0xf]
    %v60 = vld [vmem:[#allocation6 + $0x30] sm:$0xff]
    %v61 = vld [vmem:[#allocation6 + $0x38] sm:$0xf]
    %v62 = vld [vmem:[#allocation6 + $0x3c] sm:$0xff]
    %v63 = vld [vmem:[#allocation6 + $0x44] sm:$0xf]
    %v64 = vld [vmem:[#allocation6 + $0x48] sm:$0xff]
    %v65 = vld [vmem:[#allocation6 + $0x50] sm:$0xf]
    %v66 = vld [vmem:[#allocation6 + $0x54] sm:$0xff]
    %v67 = vld [vmem:[#allocation6 + $0x5c] sm:$0xf]
    %v68 = vld [vmem:[#allocation6 + $0x60] sm:$0xff]
    %v69 = vld [vmem:[#allocation6 + $0x68] sm:$0xf]
    %v70 = vld [vmem:[#allocation6 + $0x6c] sm:$0xff]
    %v71 = vld [vmem:[#allocation6 + $0x74] sm:$0xf]
    %v72 = vld [vmem:[#allocation6 + $0x78] sm:$0xff]
    %v73 = vld [vmem:[#allocation6 + $0x80] sm:$0xf]
    %v74 = vld [vmem:[#allocation6 + $0x84] sm:$0xff]
    %v75 = vld [vmem:[#allocation6 + $0x8c] sm:$0xf]
    %v76 = vld [vmem:[#allocation6 + $0x90] sm:$0xff]
    %v77 = vld [vmem:[#allocation6 + $0x98] sm:$0xf]
    %v78 = vld [vmem:[#allocation6 + $0x9c] sm:$0xff]
    %v79 = vld [vmem:[#allocation6 + $0xa4] sm:$0xf]
    %v80 = vld [vmem:[#allocation6 + $0xa8] sm:$0xff]
    %v81 = vld [vmem:[#allocation6 + $0xb0] sm:$0xf]
    %v82 = vld [vmem:[#allocation6 + $0xb4] sm:$0xff]
    %v83 = vld [vmem:[#allocation6 + $0xbc] sm:$0xf]
    %v84 = vld [vmem:[%s2] sm:$0x1]
    %v85 = vld [vmem:[#allocation2] sm:$0xff]
    %v86 = vld [vmem:[#allocation3] sm:$0xff]
    %v87 = vld [vmem:[#allocation3 + $0x8] sm:$0xff]
    %v88 = vld [vmem:[#allocation3 + $0x10] sm:$0xff]
    %v89 = vpack.c.bf16 %v85, %v85
    %v122 = vunpack.c.l.b16 %v52
    %v123 = vunpack.c.h.b16 %v52
    %v124 = vunpack.c.l.b16 %v53
    %v125 = vunpack.c.l.b16 %v54
    %v126 = vunpack.c.h.b16 %v54
    %v127 = vunpack.c.l.b16 %v55
    %v128 = vunpack.c.l.b16 %v56
    %v129 = vunpack.c.h.b16 %v56
    %v130 = vunpack.c.l.b16 %v57
    %v131 = vunpack.c.l.b16 %v58
    %v132 = vunpack.c.h.b16 %v58
    %v133 = vunpack.c.l.b16 %v59
    %v134 = vunpack.c.l.b16 %v60
    %v135 = vunpack.c.h.b16 %v60
    %v136 = vunpack.c.l.b16 %v61
    %v137 = vunpack.c.l.b16 %v62
    %v138 = vunpack.c.h.b16 %v62
    %v139 = vunpack.c.l.b16 %v63
    %v140 = vunpack.c.l.b16 %v64
    %v141 = vunpack.c.h.b16 %v64
    %v142 = vunpack.c.l.b16 %v65
    %v143 = vunpack.c.l.b16 %v66
    %v144 = vunpack.c.h.b16 %v66
    %v145 = vunpack.c.l.b16 %v67
    %v146 = vunpack.c.l.b16 %v68
    %v147 = vunpack.c.h.b16 %v68
    %v148 = vunpack.c.l.b16 %v69
    %v149 = vunpack.c.l.b16 %v70
    %v150 = vunpack.c.h.b16 %v70
    %v151 = vunpack.c.l.b16 %v71
    %v152 = vunpack.c.l.b16 %v72
    %v153 = vunpack.c.h.b16 %v72
    %v154 = vunpack.c.l.b16 %v73
    %v155 = vunpack.c.l.b16 %v74
    %v156 = vunpack.c.h.b16 %v74
    %v157 = vunpack.c.l.b16 %v75
    %v158 = vunpack.c.l.b16 %v76
    %v159 = vunpack.c.h.b16 %v76
    %v160 = vunpack.c.l.b16 %v77
    %v161 = vunpack.c.l.b16 %v78
    %v162 = vunpack.c.h.b16 %v78
    %v163 = vunpack.c.l.b16 %v79
    %v164 = vunpack.c.l.b16 %v80
    %v165 = vunpack.c.h.b16 %v80
    %v166 = vunpack.c.l.b16 %v81
    %v167 = vunpack.c.l.b16 %v82
    %v168 = vunpack.c.h.b16 %v82
    %v169 = vunpack.c.l.b16 %v83
    %v170 = vpack.c.b16 %v125, %v122
    %v171 = vpack.c.b16 %v126, %v123
    %v172 = vpack.c.b16 %v127, %v124
    %v173 = vpack.c.b16 %v131, %v128
    %v174 = vpack.c.b16 %v132, %v129
    %v175 = vpack.c.b16 %v133, %v130
    %v176 = vpack.c.b16 %v137, %v134
    %v177 = vpack.c.b16 %v138, %v135
    %v178 = vpack.c.b16 %v139, %v136
    %v179 = vpack.c.b16 %v143, %v140
    %v180 = vpack.c.b16 %v144, %v141
    %v181 = vpack.c.b16 %v145, %v142
    %v182 = vpack.c.b16 %v149, %v146
    %v183 = vpack.c.b16 %v150, %v147
    %v184 = vpack.c.b16 %v151, %v148
    %v185 = vpack.c.b16 %v155, %v152
    %v186 = vpack.c.b16 %v156, %v153
    %v187 = vpack.c.b16 %v157, %v154
    %v188 = vpack.c.b16 %v161, %v158
    %v189 = vpack.c.b16 %v162, %v159
    %v190 = vpack.c.b16 %v163, %v160
    %v191 = vpack.c.b16 %v167, %v164
    %v192 = vpack.c.b16 %v168, %v165
    %v193 = vpack.c.b16 %v169, %v166
    %218 = vmatpush.bf16.msra.mxu0 %v191
    %219 = vmatpush.bf16.msra.mxu0 %v188
    %220 = vmatpush.bf16.msra.mxu0 %v185
    %221 = vmatpush.bf16.msra.mxu0 %v182
    %222 = vmatpush.bf16.msra.mxu0 %v179
    %223 = vmatpush.bf16.msra.mxu0 %v176
    %224 = vmatpush.bf16.msra.mxu0 %v173
    %225 = vmatpush.bf16.msra.mxu0 %v170
    %226 = vmatmul.bf16.gmra.mxu0 %v89
    %v227 = vpop.f32.mrf.mxu0
    %v228 = vadd.f32 0.0, %v227
    %v229 = vpop.f32.mrf.mxu0
    %230 = vdwg.mxu0
    %231 = vmatpush.bf16.msra.mxu0 %v192
    %232 = vmatpush.bf16.msra.mxu0 %v189
    %233 = vmatpush.bf16.msra.mxu0 %v186
    %234 = vmatpush.bf16.msra.mxu0 %v183
    %235 = vmatpush.bf16.msra.mxu0 %v180
    %236 = vmatpush.bf16.msra.mxu0 %v177
    %237 = vmatpush.bf16.msra.mxu0 %v174
    %238 = vmatpush.bf16.msra.mxu0 %v171
    %239 = vmatmul.bf16.gmra.mxu0 %v89
    %v240 = vpop.f32.mrf.mxu0
    %v241 = vadd.f32 0.0, %v240
    %v242 = vpop.f32.mrf.mxu0
    %243 = vdwg.mxu0
    %244 = vmatpush.bf16.msra.mxu0 %v193
    %245 = vmatpush.bf16.msra.mxu0 %v190
    %246 = vmatpush.bf16.msra.mxu0 %v187
    %247 = vmatpush.bf16.msra.mxu0 %v184
    %248 = vmatpush.bf16.msra.mxu0 %v181
    %249 = vmatpush.bf16.msra.mxu0 %v178
    %250 = vmatpush.bf16.msra.mxu0 %v175
    %251 = vmatpush.bf16.msra.mxu0 %v172
    %252 = vmatmul.bf16.gmra.mxu0 %v89
    %v253 = vpop.f32.mrf.mxu0
    %v254 = vadd.f32 0.0, %v253
    %v255 = vpop.f32.mrf.mxu0
    %256 = vdwg.mxu0
    %v257 = vadd.f32 %v86, %v228
    %v258 = vxor.u32 %v257, 2147483648
    %v259 = vmul.f32 %v258, 1.442695
    %v260 = vpow.pop %v259
    %v261 = vadd.f32 %v260, 1.0
    %v262 = vrcp.pop %v261
    %v263 = vmul.f32 %v261, %v262
    %v264 = vsub.f32 1.0, %v263
    %v265 = vmul.f32 %v262, %v264
    %v266 = vadd.f32 %v262, %v265
    %vm267 = vweird.f32 %v261
    %vm268 = vweird.f32 %v262
    %vm269 = vmor %vm267, %vm268
    %v270 = vsel %vm269, %v262, %v266
    %v271 = vand.u32 2147483647, %v261
    %vm272 = vcmp.eq.f32.partialorder %v271, 8.507059e+37
    %v273 = vand.u32 %v261, 2147483648
    %v274 = vor.u32 1.1754944e-38, %v273
    %v275 = vsel %vm272, %v274, %v270
    %v276 = vmul.f32 1.0, %v275
    %v277 = vadd.f32 %v87, %v241
    %v278 = vxor.u32 %v277, 2147483648
    %v279 = vmul.f32 %v278, 1.442695
    %v280 = vpow.pop %v279
    %v281 = vadd.f32 %v280, 1.0
    %v282 = vrcp.pop %v281
    %v283 = vmul.f32 %v281, %v282
    %v284 = vsub.f32 1.0, %v283
    %v285 = vmul.f32 %v282, %v284
    %v286 = vadd.f32 %v282, %v285
    %vm287 = vweird.f32 %v281
    %vm288 = vweird.f32 %v282
    %vm289 = vmor %vm287, %vm288
    %v290 = vsel %vm289, %v282, %v286
    %v291 = vand.u32 2147483647, %v281
    %vm292 = vcmp.eq.f32.partialorder %v291, 8.507059e+37
    %v293 = vand.u32 %v281, 2147483648
    %v294 = vor.u32 1.1754944e-38, %v293
    %v295 = vsel %vm292, %v294, %v290
    %v296 = vmul.f32 1.0, %v295
    %v298 = vperm.slane %v84, 0
    %v300 = vadd.f32 %v254, %v298
    %v301 = vmul.f32 %v276, %v300
    %v302 = vadd.f32 %v88, %v301
    %v303 = vtanh.pop %v302
    %v304 = vsub.f32 1.0, %v296
    %v305 = vmul.f32 %v304, %v303
    %v306 = vmul.f32 %v296, %v85
    %v307 = vadd.f32 %v305, %v306
    %308 = vst [vmem:[#allocation8] sm:$0xff] %v307
    %s309 = scalar_lea.vmem [#allocation3], 24
    %v310 = vld [vmem:[%s309] sm:$0xff]
    %v311 = vld [vmem:[%s309 + $0x8] sm:$0xff]
    %v312 = vld [vmem:[%s309 + $0x10] sm:$0xff]
    %v313 = vpack.c.bf16 %v307, %v307
    %314 = vmatpush.bf16.msra.mxu0 %v191
    %315 = vmatpush.bf16.msra.mxu0 %v188
    %316 = vmatpush.bf16.msra.mxu0 %v185
    %317 = vmatpush.bf16.msra.mxu0 %v182
    %318 = vmatpush.bf16.msra.mxu0 %v179
    %319 = vmatpush.bf16.msra.mxu0 %v176
    %320 = vmatpush.bf16.msra.mxu0 %v173
    %321 = vmatpush.bf16.msra.mxu0 %v170
    %322 = vmatmul.bf16.gmra.mxu0 %v313
    %v323 = vpop.f32.mrf.mxu0
    %v324 = vadd.f32 0.0, %v323
    %v325 = vpop.f32.mrf.mxu0
    %326 = vdwg.mxu0
    %327 = vmatpush.bf16.msra.mxu0 %v192
    %328 = vmatpush.bf16.msra.mxu0 %v189
    %329 = vmatpush.bf16.msra.mxu0 %v186
    %330 = vmatpush.bf16.msra.mxu0 %v183
    %331 = vmatpush.bf16.msra.mxu0 %v180
    %332 = vmatpush.bf16.msra.mxu0 %v177
    %333 = vmatpush.bf16.msra.mxu0 %v174
    %334 = vmatpush.bf16.msra.mxu0 %v171
    %335 = vmatmul.bf16.gmra.mxu0 %v313
    %v336 = vpop.f32.mrf.mxu0
    %v337 = vadd.f32 0.0, %v336
    %v338 = vpop.f32.mrf.mxu0
    %339 = vdwg.mxu0
    %340 = vmatpush.bf16.msra.mxu0 %v193
    %341 = vmatpush.bf16.msra.mxu0 %v190
    %342 = vmatpush.bf16.msra.mxu0 %v187
    %343 = vmatpush.bf16.msra.mxu0 %v184
    %344 = vmatpush.bf16.msra.mxu0 %v181
    %345 = vmatpush.bf16.msra.mxu0 %v178
    %346 = vmatpush.bf16.msra.mxu0 %v175
    %347 = vmatpush.bf16.msra.mxu0 %v172
    %348 = vmatmul.bf16.gmra.mxu0 %v313
    %v349 = vpop.f32.mrf.mxu0
    %v350 = vadd.f32 0.0, %v349
    %v351 = vpop.f32.mrf.mxu0
    %352 = vdwg.mxu0
    %v353 = vadd.f32 %v310, %v324
    %v354 = vxor.u32 %v353, 2147483648
    %v355 = vmul.f32 %v354, 1.442695
    %v356 = vpow.pop %v355
    %v357 = vadd.f32 %v356, 1.0
    %v358 = vrcp.pop %v357
    %v359 = vmul.f32 %v357, %v358
    %v360 = vsub.f32 1.0, %v359
    %v361 = vmul.f32 %v358, %v360
    %v362 = vadd.f32 %v358, %v361
    %vm363 = vweird.f32 %v357
    %vm364 = vweird.f32 %v358
    %vm365 = vmor %vm363, %vm364
    %v366 = vsel %vm365, %v358, %v362
    %v367 = vand.u32 2147483647, %v357
    %vm368 = vcmp.eq.f32.partialorder %v367, 8.507059e+37
    %v369 = vand.u32 %v357, 2147483648
    %v370 = vor.u32 1.1754944e-38, %v369
    %v371 = vsel %vm368, %v370, %v366
    %v372 = vmul.f32 1.0, %v371
    %v373 = vadd.f32 %v311, %v337
    %v374 = vxor.u32 %v373, 2147483648
    %v375 = vmul.f32 %v374, 1.442695
    %v376 = vpow.pop %v375
    %v377 = vadd.f32 %v376, 1.0
    %v378 = vrcp.pop %v377
    %v379 = vmul.f32 %v377, %v378
    %v380 = vsub.f32 1.0, %v379
    %v381 = vmul.f32 %v378, %v380
    %v382 = vadd.f32 %v378, %v381
    %vm383 = vweird.f32 %v377
    %vm384 = vweird.f32 %v378
    %vm385 = vmor %vm383, %vm384
    %v386 = vsel %vm385, %v378, %v382
    %v387 = vand.u32 2147483647, %v377
    %vm388 = vcmp.eq.f32.partialorder %v387, 8.507059e+37
    %v389 = vand.u32 %v377, 2147483648
    %v390 = vor.u32 1.1754944e-38, %v389
    %v391 = vsel %vm388, %v390, %v386
    %v392 = vmul.f32 1.0, %v391
    %v393 = vadd.f32 %v350, %v298
    %v394 = vmul.f32 %v372, %v393
    %v395 = vadd.f32 %v312, %v394
    %v396 = vtanh.pop %v395
    %v397 = vsub.f32 1.0, %v392
    %v398 = vmul.f32 %v397, %v396
    %v399 = vmul.f32 %v392, %v307
    %v400 = vadd.f32 %v398, %v399
    %s401 = scalar_lea.vmem [#allocation8], 8
    %402 = vst [vmem:[%s401] sm:$0xff] %v400
    %s403 = scalar_lea.vmem [#allocation3], 48
    %v404 = vld [vmem:[%s403] sm:$0xff]
    %v405 = vld [vmem:[%s403 + $0x8] sm:$0xff]
    %v406 = vld [vmem:[%s403 + $0x10] sm:$0xff]
    %v407 = vpack.c.bf16 %v400, %v400
    %408 = vmatpush.bf16.msra.mxu0 %v191
    %409 = vmatpush.bf16.msra.mxu0 %v188
    %410 = vmatpush.bf16.msra.mxu0 %v185
    %411 = vmatpush.bf16.msra.mxu0 %v182
    %412 = vmatpush.bf16.msra.mxu0 %v179
    %413 = vmatpush.bf16.msra.mxu0 %v176
    %414 = vmatpush.bf16.msra.mxu0 %v173
    %415 = vmatpush.bf16.msra.mxu0 %v170
    %416 = vmatmul.bf16.gmra.mxu0 %v407
    %v417 = vpop.f32.mrf.mxu0
    %v418 = vadd.f32 0.0, %v417
    %v419 = vpop.f32.mrf.mxu0
    %420 = vdwg.mxu0
    %421 = vmatpush.bf16.msra.mxu0 %v192
    %422 = vmatpush.bf16.msra.mxu0 %v189
    %423 = vmatpush.bf16.msra.mxu0 %v186
    %424 = vmatpush.bf16.msra.mxu0 %v183
    %425 = vmatpush.bf16.msra.mxu0 %v180
    %426 = vmatpush.bf16.msra.mxu0 %v177
    %427 = vmatpush.bf16.msra.mxu0 %v174
    %428 = vmatpush.bf16.msra.mxu0 %v171
    %429 = vmatmul.bf16.gmra.mxu0 %v407
    %v430 = vpop.f32.mrf.mxu0
    %v431 = vadd.f32 0.0, %v430
    %v432 = vpop.f32.mrf.mxu0
    %433 = vdwg.mxu0
    %434 = vmatpush.bf16.msra.mxu0 %v193
    %435 = vmatpush.bf16.msra.mxu0 %v190
    %436 = vmatpush.bf16.msra.mxu0 %v187
    %437 = vmatpush.bf16.msra.mxu0 %v184
    %438 = vmatpush.bf16.msra.mxu0 %v181
    %439 = vmatpush.bf16.msra.mxu0 %v178
    %440 = vmatpush.bf16.msra.mxu0 %v175
    %441 = vmatpush.bf16.msra.mxu0 %v172
    %442 = vmatmul.bf16.gmra.mxu0 %v407
    %v443 = vpop.f32.mrf.mxu0
    %v444 = vadd.f32 0.0, %v443
    %v445 = vpop.f32.mrf.mxu0
    %446 = vdwg.mxu0
    %v447 = vadd.f32 %v404, %v418
    %v448 = vxor.u32 %v447, 2147483648
    %v449 = vmul.f32 %v448, 1.442695
    %v450 = vpow.pop %v449
    %v451 = vadd.f32 %v450, 1.0
    %v452 = vrcp.pop %v451
    %v453 = vmul.f32 %v451, %v452
    %v454 = vsub.f32 1.0, %v453
    %v455 = vmul.f32 %v452, %v454
    %v456 = vadd.f32 %v452, %v455
    %vm457 = vweird.f32 %v451
    %vm458 = vweird.f32 %v452
    %vm459 = vmor %vm457, %vm458
    %v460 = vsel %vm459, %v452, %v456
    %v461 = vand.u32 2147483647, %v451
    %vm462 = vcmp.eq.f32.partialorder %v461, 8.507059e+37
    %v463 = vand.u32 %v451, 2147483648
    %v464 = vor.u32 1.1754944e-38, %v463
    %v465 = vsel %vm462, %v464, %v460
    %v466 = vmul.f32 1.0, %v465
    %v467 = vadd.f32 %v405, %v431
    %v468 = vxor.u32 %v467, 2147483648
    %v469 = vmul.f32 %v468, 1.442695
    %v470 = vpow.pop %v469
    %v471 = vadd.f32 %v470, 1.0
    %v472 = vrcp.pop %v471
    %v473 = vmul.f32 %v471, %v472
    %v474 = vsub.f32 1.0, %v473
    %v475 = vmul.f32 %v472, %v474
    %v476 = vadd.f32 %v472, %v475
    %vm477 = vweird.f32 %v471
    %vm478 = vweird.f32 %v472
    %vm479 = vmor %vm477, %vm478
    %v480 = vsel %vm479, %v472, %v476
    %v481 = vand.u32 2147483647, %v471
    %vm482 = vcmp.eq.f32.partialorder %v481, 8.507059e+37
    %v483 = vand.u32 %v471, 2147483648
    %v484 = vor.u32 1.1754944e-38, %v483
    %v485 = vsel %vm482, %v484, %v480
    %v486 = vmul.f32 1.0, %v485
    %v487 = vadd.f32 %v444, %v298
    %v488 = vmul.f32 %v466, %v487
    %v489 = vadd.f32 %v406, %v488
    %v490 = vtanh.pop %v489
    %v491 = vsub.f32 1.0, %v486
    %v492 = vmul.f32 %v491, %v490
    %v493 = vmul.f32 %v486, %v400
    %v494 = vadd.f32 %v492, %v493
    %s495 = scalar_lea.vmem [#allocation8], 16
    %496 = vst [vmem:[%s495] sm:$0xff] %v494
    %s497 = scalar_lea.vmem [#allocation3], 72
    %v498 = vld [vmem:[%s497] sm:$0xff]
    %v499 = vld [vmem:[%s497 + $0x8] sm:$0xff]
    %v500 = vld [vmem:[%s497 + $0x10] sm:$0xff]
    %v501 = vpack.c.bf16 %v494, %v494
    %502 = vmatpush.bf16.msra.mxu0 %v191
    %503 = vmatpush.bf16.msra.mxu0 %v188
    %504 = vmatpush.bf16.msra.mxu0 %v185
    %505 = vmatpush.bf16.msra.mxu0 %v182
    %506 = vmatpush.bf16.msra.mxu0 %v179
    %507 = vmatpush.bf16.msra.mxu0 %v176
    %508 = vmatpush.bf16.msra.mxu0 %v173
    %509 = vmatpush.bf16.msra.mxu0 %v170
    %510 = vmatmul.bf16.gmra.mxu0 %v501
    %v511 = vpop.f32.mrf.mxu0
    %v512 = vadd.f32 0.0, %v511
    %v513 = vpop.f32.mrf.mxu0
    %514 = vdwg.mxu0
    %515 = vmatpush.bf16.msra.mxu0 %v192
    %516 = vmatpush.bf16.msra.mxu0 %v189
    %517 = vmatpush.bf16.msra.mxu0 %v186
    %518 = vmatpush.bf16.msra.mxu0 %v183
    %519 = vmatpush.bf16.msra.mxu0 %v180
    %520 = vmatpush.bf16.msra.mxu0 %v177
    %521 = vmatpush.bf16.msra.mxu0 %v174
    %522 = vmatpush.bf16.msra.mxu0 %v171
    %523 = vmatmul.bf16.gmra.mxu0 %v501
    %v524 = vpop.f32.mrf.mxu0
    %v525 = vadd.f32 0.0, %v524
    %v526 = vpop.f32.mrf.mxu0
    %527 = vdwg.mxu0
    %528 = vmatpush.bf16.msra.mxu0 %v193
    %529 = vmatpush.bf16.msra.mxu0 %v190
    %530 = vmatpush.bf16.msra.mxu0 %v187
    %531 = vmatpush.bf16.msra.mxu0 %v184
    %532 = vmatpush.bf16.msra.mxu0 %v181
    %533 = vmatpush.bf16.msra.mxu0 %v178
    %534 = vmatpush.bf16.msra.mxu0 %v175
    %535 = vmatpush.bf16.msra.mxu0 %v172
    %536 = vmatmul.bf16.gmra.mxu0 %v501
    %v537 = vpop.f32.mrf.mxu0
    %v538 = vadd.f32 0.0, %v537
    %v539 = vpop.f32.mrf.mxu0
    %540 = vdwg.mxu0
    %v541 = vadd.f32 %v498, %v512
    %v542 = vxor.u32 %v541, 2147483648
    %v543 = vmul.f32 %v542, 1.442695
    %v544 = vpow.pop %v543
    %v545 = vadd.f32 %v544, 1.0
    %v546 = vrcp.pop %v545
    %v547 = vmul.f32 %v545, %v546
    %v548 = vsub.f32 1.0, %v547
    %v549 = vmul.f32 %v546, %v548
    %v550 = vadd.f32 %v546, %v549
    %vm551 = vweird.f32 %v545
    %vm552 = vweird.f32 %v546
    %vm553 = vmor %vm551, %vm552
    %v554 = vsel %vm553, %v546, %v550
    %v555 = vand.u32 2147483647, %v545
    %vm556 = vcmp.eq.f32.partialorder %v555, 8.507059e+37
    %v557 = vand.u32 %v545, 2147483648
    %v558 = vor.u32 1.1754944e-38, %v557
    %v559 = vsel %vm556, %v558, %v554
    %v560 = vmul.f32 1.0, %v559
    %v561 = vadd.f32 %v499, %v525
    %v562 = vxor.u32 %v561, 2147483648
    %v563 = vmul.f32 %v562, 1.442695
    %v564 = vpow.pop %v563
    %v565 = vadd.f32 %v564, 1.0
    %v566 = vrcp.pop %v565
    %v567 = vmul.f32 %v565, %v566
    %v568 = vsub.f32 1.0, %v567
    %v569 = vmul.f32 %v566, %v568
    %v570 = vadd.f32 %v566, %v569
    %vm571 = vweird.f32 %v565
    %vm572 = vweird.f32 %v566
    %vm573 = vmor %vm571, %vm572
    %v574 = vsel %vm573, %v566, %v570
    %v575 = vand.u32 2147483647, %v565
    %vm576 = vcmp.eq.f32.partialorder %v575, 8.507059e+37
    %v577 = vand.u32 %v565, 2147483648
    %v578 = vor.u32 1.1754944e-38, %v577
    %v579 = vsel %vm576, %v578, %v574
    %v580 = vmul.f32 1.0, %v579
    %v581 = vadd.f32 %v538, %v298
    %v582 = vmul.f32 %v560, %v581
    %v583 = vadd.f32 %v500, %v582
    %v584 = vtanh.pop %v583
    %v585 = vsub.f32 1.0, %v580
    %v586 = vmul.f32 %v585, %v584
    %v587 = vmul.f32 %v580, %v494
    %v588 = vadd.f32 %v586, %v587
    %s589 = scalar_lea.vmem [#allocation8], 24
    %590 = vst [vmem:[%s589] sm:$0xff] %v588
    %s591 = scalar_lea.vmem [#allocation3], 96
    %v592 = vld [vmem:[%s591] sm:$0xff]
    %v593 = vld [vmem:[%s591 + $0x8] sm:$0xff]
    %v594 = vld [vmem:[%s591 + $0x10] sm:$0xff]
    %v595 = vpack.c.bf16 %v588, %v588
    %596 = vmatpush.bf16.msra.mxu0 %v191
    %597 = vmatpush.bf16.msra.mxu0 %v188
    %598 = vmatpush.bf16.msra.mxu0 %v185
    %599 = vmatpush.bf16.msra.mxu0 %v182
    %600 = vmatpush.bf16.msra.mxu0 %v179
    %601 = vmatpush.bf16.msra.mxu0 %v176
    %602 = vmatpush.bf16.msra.mxu0 %v173
    %603 = vmatpush.bf16.msra.mxu0 %v170
    %604 = vmatmul.bf16.gmra.mxu0 %v595
    %v605 = vpop.f32.mrf.mxu0
    %v606 = vadd.f32 0.0, %v605
    %v607 = vpop.f32.mrf.mxu0
    %608 = vdwg.mxu0
    %609 = vmatpush.bf16.msra.mxu0 %v192
    %610 = vmatpush.bf16.msra.mxu0 %v189
    %611 = vmatpush.bf16.msra.mxu0 %v186
    %612 = vmatpush.bf16.msra.mxu0 %v183
    %613 = vmatpush.bf16.msra.mxu0 %v180
    %614 = vmatpush.bf16.msra.mxu0 %v177
    %615 = vmatpush.bf16.msra.mxu0 %v174
    %616 = vmatpush.bf16.msra.mxu0 %v171
    %617 = vmatmul.bf16.gmra.mxu0 %v595
    %v618 = vpop.f32.mrf.mxu0
    %v619 = vadd.f32 0.0, %v618
    %v620 = vpop.f32.mrf.mxu0
    %621 = vdwg.mxu0
    %622 = vmatpush.bf16.msra.mxu0 %v193
    %623 = vmatpush.bf16.msra.mxu0 %v190
    %624 = vmatpush.bf16.msra.mxu0 %v187
    %625 = vmatpush.bf16.msra.mxu0 %v184
    %626 = vmatpush.bf16.msra.mxu0 %v181
    %627 = vmatpush.bf16.msra.mxu0 %v178
    %628 = vmatpush.bf16.msra.mxu0 %v175
    %629 = vmatpush.bf16.msra.mxu0 %v172
    %630 = vmatmul.bf16.gmra.mxu0 %v595
    %v631 = vpop.f32.mrf.mxu0
    %v632 = vadd.f32 0.0, %v631
    %v633 = vpop.f32.mrf.mxu0
    %634 = vdwg.mxu0
    %v635 = vadd.f32 %v592, %v606
    %v636 = vxor.u32 %v635, 2147483648
    %v637 = vmul.f32 %v636, 1.442695
    %v638 = vpow.pop %v637
    %v639 = vadd.f32 %v638, 1.0
    %v640 = vrcp.pop %v639
    %v641 = vmul.f32 %v639, %v640
    %v642 = vsub.f32 1.0, %v641
    %v643 = vmul.f32 %v640, %v642
    %v644 = vadd.f32 %v640, %v643
    %vm645 = vweird.f32 %v639
    %vm646 = vweird.f32 %v640
    %vm647 = vmor %vm645, %vm646
    %v648 = vsel %vm647, %v640, %v644
    %v649 = vand.u32 2147483647, %v639
    %vm650 = vcmp.eq.f32.partialorder %v649, 8.507059e+37
    %v651 = vand.u32 %v639, 2147483648
    %v652 = vor.u32 1.1754944e-38, %v651
    %v653 = vsel %vm650, %v652, %v648
    %v654 = vmul.f32 1.0, %v653
    %v655 = vadd.f32 %v593, %v619
    %v656 = vxor.u32 %v655, 2147483648
    %v657 = vmul.f32 %v656, 1.442695
    %v658 = vpow.pop %v657
    %v659 = vadd.f32 %v658, 1.0
    %v660 = vrcp.pop %v659
    %v661 = vmul.f32 %v659, %v660
    %v662 = vsub.f32 1.0, %v661
    %v663 = vmul.f32 %v660, %v662
    %v664 = vadd.f32 %v660, %v663
    %vm665 = vweird.f32 %v659
    %vm666 = vweird.f32 %v660
    %vm667 = vmor %vm665, %vm666
    %v668 = vsel %vm667, %v660, %v664
    %v669 = vand.u32 2147483647, %v659
    %vm670 = vcmp.eq.f32.partialorder %v669, 8.507059e+37
    %v671 = vand.u32 %v659, 2147483648
    %v672 = vor.u32 1.1754944e-38, %v671
    %v673 = vsel %vm670, %v672, %v668
    %v674 = vmul.f32 1.0, %v673
    %v675 = vadd.f32 %v632, %v298
    %v676 = vmul.f32 %v654, %v675
    %v677 = vadd.f32 %v594, %v676
    %v678 = vtanh.pop %v677
    %v679 = vsub.f32 1.0, %v674
    %v680 = vmul.f32 %v679, %v678
    %v681 = vmul.f32 %v674, %v588
    %v682 = vadd.f32 %v680, %v681
    %s683 = scalar_lea.vmem [#allocation8], 32
    %684 = vst [vmem:[%s683] sm:$0xff] %v682
    %s685 = scalar_lea.vmem [#allocation3], 120
    %v686 = vld [vmem:[%s685] sm:$0xff]
    %v687 = vld [vmem:[%s685 + $0x8] sm:$0xff]
    %v688 = vld [vmem:[%s685 + $0x10] sm:$0xff]
    %v689 = vpack.c.bf16 %v682, %v682
    %690 = vmatpush.bf16.msra.mxu0 %v191
    %691 = vmatpush.bf16.msra.mxu0 %v188
    %692 = vmatpush.bf16.msra.mxu0 %v185
    %693 = vmatpush.bf16.msra.mxu0 %v182
    %694 = vmatpush.bf16.msra.mxu0 %v179
    %695 = vmatpush.bf16.msra.mxu0 %v176
    %696 = vmatpush.bf16.msra.mxu0 %v173
    %697 = vmatpush.bf16.msra.mxu0 %v170
    %698 = vmatmul.bf16.gmra.mxu0 %v689
    %v699 = vpop.f32.mrf.mxu0
    %v700 = vadd.f32 0.0, %v699
    %v701 = vpop.f32.mrf.mxu0
    %702 = vdwg.mxu0
    %703 = vmatpush.bf16.msra.mxu0 %v192
    %704 = vmatpush.bf16.msra.mxu0 %v189
    %705 = vmatpush.bf16.msra.mxu0 %v186
    %706 = vmatpush.bf16.msra.mxu0 %v183
    %707 = vmatpush.bf16.msra.mxu0 %v180
    %708 = vmatpush.bf16.msra.mxu0 %v177
    %709 = vmatpush.bf16.msra.mxu0 %v174
    %710 = vmatpush.bf16.msra.mxu0 %v171
    %711 = vmatmul.bf16.gmra.mxu0 %v689
    %v712 = vpop.f32.mrf.mxu0
    %v713 = vadd.f32 0.0, %v712
    %v714 = vpop.f32.mrf.mxu0
    %715 = vdwg.mxu0
    %716 = vmatpush.bf16.msra.mxu0 %v193
    %717 = vmatpush.bf16.msra.mxu0 %v190
    %718 = vmatpush.bf16.msra.mxu0 %v187
    %719 = vmatpush.bf16.msra.mxu0 %v184
    %720 = vmatpush.bf16.msra.mxu0 %v181
    %721 = vmatpush.bf16.msra.mxu0 %v178
    %722 = vmatpush.bf16.msra.mxu0 %v175
    %723 = vmatpush.bf16.msra.mxu0 %v172
    %724 = vmatmul.bf16.gmra.mxu0 %v689
    %v725 = vpop.f32.mrf.mxu0
    %v726 = vadd.f32 0.0, %v725
    %v727 = vpop.f32.mrf.mxu0
    %728 = vdwg.mxu0
    %v729 = vadd.f32 %v686, %v700
    %v730 = vxor.u32 %v729, 2147483648
    %v731 = vmul.f32 %v730, 1.442695
    %v732 = vpow.pop %v731
    %v733 = vadd.f32 %v732, 1.0
    %v734 = vrcp.pop %v733
    %v735 = vmul.f32 %v733, %v734
    %v736 = vsub.f32 1.0, %v735
    %v737 = vmul.f32 %v734, %v736
    %v738 = vadd.f32 %v734, %v737
    %vm739 = vweird.f32 %v733
    %vm740 = vweird.f32 %v734
    %vm741 = vmor %vm739, %vm740
    %v742 = vsel %vm741, %v734, %v738
    %v743 = vand.u32 2147483647, %v733
    %vm744 = vcmp.eq.f32.partialorder %v743, 8.507059e+37
    %v745 = vand.u32 %v733, 2147483648
    %v746 = vor.u32 1.1754944e-38, %v745
    %v747 = vsel %vm744, %v746, %v742
    %v748 = vmul.f32 1.0, %v747
    %v749 = vadd.f32 %v687, %v713
    %v750 = vxor.u32 %v749, 2147483648
    %v751 = vmul.f32 %v750, 1.442695
    %v752 = vpow.pop %v751
    %v753 = vadd.f32 %v752, 1.0
    %v754 = vrcp.pop %v753
    %v755 = vmul.f32 %v753, %v754
    %v756 = vsub.f32 1.0, %v755
    %v757 = vmul.f32 %v754, %v756
    %v758 = vadd.f32 %v754, %v757
    %vm759 = vweird.f32 %v753
    %vm760 = vweird.f32 %v754
    %vm761 = vmor %vm759, %vm760
    %v762 = vsel %vm761, %v754, %v758
    %v763 = vand.u32 2147483647, %v753
    %vm764 = vcmp.eq.f32.partialorder %v763, 8.507059e+37
    %v765 = vand.u32 %v753, 2147483648
    %v766 = vor.u32 1.1754944e-38, %v765
    %v767 = vsel %vm764, %v766, %v762
    %v768 = vmul.f32 1.0, %v767
    %v769 = vadd.f32 %v726, %v298
    %v770 = vmul.f32 %v748, %v769
    %v771 = vadd.f32 %v688, %v770
    %v772 = vtanh.pop %v771
    %v773 = vsub.f32 1.0, %v768
    %v774 = vmul.f32 %v773, %v772
    %v775 = vmul.f32 %v768, %v682
    %v776 = vadd.f32 %v774, %v775
    %s777 = scalar_lea.vmem [#allocation8], 40
    %778 = vst [vmem:[%s777] sm:$0xff] %v776
    %s779 = scalar_lea.vmem [#allocation3], 144
    %v780 = vld [vmem:[%s779] sm:$0xff]
    %v781 = vld [vmem:[%s779 + $0x8] sm:$0xff]
    %v782 = vld [vmem:[%s779 + $0x10] sm:$0xff]
    %v783 = vpack.c.bf16 %v776, %v776
    %784 = vmatpush.bf16.msra.mxu0 %v191
    %785 = vmatpush.bf16.msra.mxu0 %v188
    %786 = vmatpush.bf16.msra.mxu0 %v185
    %787 = vmatpush.bf16.msra.mxu0 %v182
    %788 = vmatpush.bf16.msra.mxu0 %v179
    %789 = vmatpush.bf16.msra.mxu0 %v176
    %790 = vmatpush.bf16.msra.mxu0 %v173
    %791 = vmatpush.bf16.msra.mxu0 %v170
    %792 = vmatmul.bf16.gmra.mxu0 %v783
    %v793 = vpop.f32.mrf.mxu0
    %v794 = vadd.f32 0.0, %v793
    %v795 = vpop.f32.mrf.mxu0
    %796 = vdwg.mxu0
    %797 = vmatpush.bf16.msra.mxu0 %v192
    %798 = vmatpush.bf16.msra.mxu0 %v189
    %799 = vmatpush.bf16.msra.mxu0 %v186
    %800 = vmatpush.bf16.msra.mxu0 %v183
    %801 = vmatpush.bf16.msra.mxu0 %v180
    %802 = vmatpush.bf16.msra.mxu0 %v177
    %803 = vmatpush.bf16.msra.mxu0 %v174
    %804 = vmatpush.bf16.msra.mxu0 %v171
    %805 = vmatmul.bf16.gmra.mxu0 %v783
    %v806 = vpop.f32.mrf.mxu0
    %v807 = vadd.f32 0.0, %v806
    %v808 = vpop.f32.mrf.mxu0
    %809 = vdwg.mxu0
    %810 = vmatpush.bf16.msra.mxu0 %v193
    %811 = vmatpush.bf16.msra.mxu0 %v190
    %812 = vmatpush.bf16.msra.mxu0 %v187
    %813 = vmatpush.bf16.msra.mxu0 %v184
    %814 = vmatpush.bf16.msra.mxu0 %v181
    %815 = vmatpush.bf16.msra.mxu0 %v178
    %816 = vmatpush.bf16.msra.mxu0 %v175
    %817 = vmatpush.bf16.msra.mxu0 %v172
    %818 = vmatmul.bf16.gmra.mxu0 %v783
    %v819 = vpop.f32.mrf.mxu0
    %v820 = vadd.f32 0.0, %v819
    %v821 = vpop.f32.mrf.mxu0
    %822 = vdwg.mxu0
    %v823 = vadd.f32 %v780, %v794
    %v824 = vxor.u32 %v823, 2147483648
    %v825 = vmul.f32 %v824, 1.442695
    %v826 = vpow.pop %v825
    %v827 = vadd.f32 %v826, 1.0
    %v828 = vrcp.pop %v827
    %v829 = vmul.f32 %v827, %v828
    %v830 = vsub.f32 1.0, %v829
    %v831 = vmul.f32 %v828, %v830
    %v832 = vadd.f32 %v828, %v831
    %vm833 = vweird.f32 %v827
    %vm834 = vweird.f32 %v828
    %vm835 = vmor %vm833, %vm834
    %v836 = vsel %vm835, %v828, %v832
    %v837 = vand.u32 2147483647, %v827
    %vm838 = vcmp.eq.f32.partialorder %v837, 8.507059e+37
    %v839 = vand.u32 %v827, 2147483648
    %v840 = vor.u32 1.1754944e-38, %v839
    %v841 = vsel %vm838, %v840, %v836
    %v842 = vmul.f32 1.0, %v841
    %v843 = vadd.f32 %v781, %v807
    %v844 = vxor.u32 %v843, 2147483648
    %v845 = vmul.f32 %v844, 1.442695
    %v846 = vpow.pop %v845
    %v847 = vadd.f32 %v846, 1.0
    %v848 = vrcp.pop %v847
    %v849 = vmul.f32 %v847, %v848
    %v850 = vsub.f32 1.0, %v849
    %v851 = vmul.f32 %v848, %v850
    %v852 = vadd.f32 %v848, %v851
    %vm853 = vweird.f32 %v847
    %vm854 = vweird.f32 %v848
    %vm855 = vmor %vm853, %vm854
    %v856 = vsel %vm855, %v848, %v852
    %v857 = vand.u32 2147483647, %v847
    %vm858 = vcmp.eq.f32.partialorder %v857, 8.507059e+37
    %v859 = vand.u32 %v847, 2147483648
    %v860 = vor.u32 1.1754944e-38, %v859
    %v861 = vsel %vm858, %v860, %v856
    %v862 = vmul.f32 1.0, %v861
    %v863 = vadd.f32 %v820, %v298
    %v864 = vmul.f32 %v842, %v863
    %v865 = vadd.f32 %v782, %v864
    %v866 = vtanh.pop %v865
    %v867 = vsub.f32 1.0, %v862
    %v868 = vmul.f32 %v867, %v866
    %v869 = vmul.f32 %v862, %v776
    %v870 = vadd.f32 %v868, %v869
    %s871 = scalar_lea.vmem [#allocation8], 48
    %872 = vst [vmem:[%s871] sm:$0xff] %v870
    %s873 = scalar_lea.vmem [#allocation3], 168
    %v874 = vld [vmem:[%s873] sm:$0xff]
    %v875 = vld [vmem:[%s873 + $0x8] sm:$0xff]
    %v876 = vld [vmem:[%s873 + $0x10] sm:$0xff]
    %v877 = vpack.c.bf16 %v870, %v870
    %878 = vmatpush.bf16.msra.mxu0 %v191
    %879 = vmatpush.bf16.msra.mxu0 %v188
    %880 = vmatpush.bf16.msra.mxu0 %v185
    %881 = vmatpush.bf16.msra.mxu0 %v182
    %882 = vmatpush.bf16.msra.mxu0 %v179
    %883 = vmatpush.bf16.msra.mxu0 %v176
    %884 = vmatpush.bf16.msra.mxu0 %v173
    %885 = vmatpush.bf16.msra.mxu0 %v170
    %886 = vmatmul.bf16.gmra.mxu0 %v877
    %v887 = vpop.f32.mrf.mxu0
    %v888 = vadd.f32 0.0, %v887
    %v889 = vpop.f32.mrf.mxu0
    %890 = vdwg.mxu0
    %891 = vmatpush.bf16.msra.mxu0 %v192
    %892 = vmatpush.bf16.msra.mxu0 %v189
    %893 = vmatpush.bf16.msra.mxu0 %v186
    %894 = vmatpush.bf16.msra.mxu0 %v183
    %895 = vmatpush.bf16.msra.mxu0 %v180
    %896 = vmatpush.bf16.msra.mxu0 %v177
    %897 = vmatpush.bf16.msra.mxu0 %v174
    %898 = vmatpush.bf16.msra.mxu0 %v171
    %899 = vmatmul.bf16.gmra.mxu0 %v877
    %v900 = vpop.f32.mrf.mxu0
    %v901 = vadd.f32 0.0, %v900
    %v902 = vpop.f32.mrf.mxu0
    %903 = vdwg.mxu0
    %904 = vmatpush.bf16.msra.mxu0 %v193
    %905 = vmatpush.bf16.msra.mxu0 %v190
    %906 = vmatpush.bf16.msra.mxu0 %v187
    %907 = vmatpush.bf16.msra.mxu0 %v184
    %908 = vmatpush.bf16.msra.mxu0 %v181
    %909 = vmatpush.bf16.msra.mxu0 %v178
    %910 = vmatpush.bf16.msra.mxu0 %v175
    %911 = vmatpush.bf16.msra.mxu0 %v172
    %912 = vmatmul.bf16.gmra.mxu0 %v877
    %v913 = vpop.f32.mrf.mxu0
    %v914 = vadd.f32 0.0, %v913
    %v915 = vpop.f32.mrf.mxu0
    %916 = vdwg.mxu0
    %v917 = vadd.f32 %v874, %v888
    %v918 = vxor.u32 %v917, 2147483648
    %v919 = vmul.f32 %v918, 1.442695
    %v920 = vpow.pop %v919
    %v921 = vadd.f32 %v920, 1.0
    %v922 = vrcp.pop %v921
    %v923 = vmul.f32 %v921, %v922
    %v924 = vsub.f32 1.0, %v923
    %v925 = vmul.f32 %v922, %v924
    %v926 = vadd.f32 %v922, %v925
    %vm927 = vweird.f32 %v921
    %vm928 = vweird.f32 %v922
    %vm929 = vmor %vm927, %vm928
    %v930 = vsel %vm929, %v922, %v926
    %v931 = vand.u32 2147483647, %v921
    %vm932 = vcmp.eq.f32.partialorder %v931, 8.507059e+37
    %v933 = vand.u32 %v921, 2147483648
    %v934 = vor.u32 1.1754944e-38, %v933
    %v935 = vsel %vm932, %v934, %v930
    %v936 = vmul.f32 1.0, %v935
    %v937 = vadd.f32 %v875, %v901
    %v938 = vxor.u32 %v937, 2147483648
    %v939 = vmul.f32 %v938, 1.442695
    %v940 = vpow.pop %v939
    %v941 = vadd.f32 %v940, 1.0
    %v942 = vrcp.pop %v941
    %v943 = vmul.f32 %v941, %v942
    %v944 = vsub.f32 1.0, %v943
    %v945 = vmul.f32 %v942, %v944
    %v946 = vadd.f32 %v942, %v945
    %vm947 = vweird.f32 %v941
    %vm948 = vweird.f32 %v942
    %vm949 = vmor %vm947, %vm948
    %v950 = vsel %vm949, %v942, %v946
    %v951 = vand.u32 2147483647, %v941
    %vm952 = vcmp.eq.f32.partialorder %v951, 8.507059e+37
    %v953 = vand.u32 %v941, 2147483648
    %v954 = vor.u32 1.1754944e-38, %v953
    %v955 = vsel %vm952, %v954, %v950
    %v956 = vmul.f32 1.0, %v955
    %v957 = vadd.f32 %v914, %v298
    %v958 = vmul.f32 %v936, %v957
    %v959 = vadd.f32 %v876, %v958
    %v960 = vtanh.pop %v959
    %v961 = vsub.f32 1.0, %v956
    %v962 = vmul.f32 %v961, %v960
    %v963 = vmul.f32 %v956, %v870
    %v964 = vadd.f32 %v962, %v963
    %s965 = scalar_lea.vmem [#allocation8], 56
    %966 = vst [vmem:[%s965] sm:$0xff] %v964
    %967 = vst [vmem:[#allocation2] sm:$0xff] %v964
    // Predicated region
    $region26: #{tpu_custom_call.1} parent=1 // pred_check
      _
    $region27: #{tpu_custom_call.1} parent=1 // pred_check_branch
      %969 = sbr.rel (0) target = $region29
    $region28: #{tpu_custom_call.1} parent=1 // pred_region
      %971 = vsyncadd [#allocation5], 0
      %s972 = sshll.u32 [#allocation8], 4
      %s973 = int_to_ptr.vmem [resolvable:$true] %s972
      %s974 = sshll.u32 %s3, 4
      %s975 = int_to_ptr.hbm [resolvable:$true] %s974
      %980 = dma.vmem_to_hbm [thread:$0]  %s973, 1024, %s975, [#allocation5], 128, 128, 8
    $region29: #{tpu_custom_call.1} parent=1 // pred_fallthru
      _
    // Predicated region
    $region30: #{tpu_custom_call.1} parent=1 // pred_check
      _
    $region31: #{tpu_custom_call.1} parent=1 // pred_check_branch
      %982 = sbr.rel (0) target = $region33
    $region32: #{tpu_custom_call.1} parent=1 // pred_region
      %984 = dma.done [#allocation5], 1024
    $region33: #{tpu_custom_call.1} parent=1 // pred_fallthru
      _
    %985 = vsyncpa [#allocation4], 1
    %986 = vsyncpa [#allocation7], 1
    %987 = vsyncpa [#allocation5], 1

</llo_original>
